<compile_context>
chip_gen: v7x
topology: tpu7x:2x2x1
jax: 0.10.0
libtpu: 0.0.40
codegen_flags: <defaults>
</compile_context>

<pallas_src>
import functools

import jax
import jax.numpy as jnp
from jax.experimental import pallas as pl
from jax.experimental.pallas import tpu as pltpu


def _round_up(x, m):
    return (x + m - 1) // m * m


def _divisors(n):
    ds = set()
    i = 1
    while i * i <= n:
        if n % i == 0:
            ds.add(i)
            ds.add(n // i)
        i += 1
    return sorted(ds)


def _vmem_budget():
    """(vmem_limit_bytes, per-kernel working-set budget) for the local TPU."""
    try:
        phys = int(pltpu.get_tpu_info().vmem_capacity_bytes)
    except Exception:
        phys = 64 * 1024 * 1024          # conservative (v7x per-TensorCore VMEM)
    limit = min(3 * phys // 4, 96 * 1024 * 1024)
    return limit, limit // 2


def _pass1_vmem_estimate(trs, H, Wp, W, C3, C2):
    m = 2 * trs * Wp
    return (2 * (H + 2) * Wp * C3 * 2        # padded source image block (x2 buffers)
            + 2 * 3 * C3 * C2 * 2            # weights (x2 buffers)
            + 2 * 2 * trs * W * C2 * 2       # bf16 conv-out block (x2 buffers)
            + (2 * trs + 4) * Wp * C3 * 2    # row-duplicated LHS source
            + 2 * m * C2 * 4                 # f32 accumulator + matmul result
            + m * C3 * 2)                    # one LHS slab of copy headroom


def _pick_row_tile(N, H, Wp, W, C3, C2, budget_bytes):
    feasible = [t for t in _divisors(H)
                if _pass1_vmem_estimate(t, H, Wp, W, C3, C2) <= budget_bytes]
    if not feasible:
        return 1
    if N == 1:
        multi = [t for t in feasible if H // t >= 2]
        if multi:
            return max(multi)            # keep both v7x TensorCores busy
    return max(feasible)


def _pick_pass2_rows(H2, W, C2, budget_bytes):
    feasible = [t for t in _divisors(H2) if t * W * C2 * 12 <= budget_bytes]
    return max(feasible) if feasible else 1


# ---------------------------------------------------------------------------
# Pass 1: fused (x2 nearest upsample + 3x3 conv) in output-row order
#         + per-tile BN statistics.  Conv result stored in bf16.
# ---------------------------------------------------------------------------
def _upconv_conv_kernel(x_ref, w_ref, conv_ref, stats_ref):
    # x_ref:     (H+2, Wp, 3*Cin)   bf16  row-padded, column-tap-gathered source
    # w_ref:     (3, 3*Cin, 2*Cout) bf16  per-ky weights, lanes = (pw, cout)
    # conv_ref:  (2*trs, W, 2*Cout) bf16  conv output rows [2*r0, 2*r0 + 2*trs)
    # stats_ref: (2, 2*Cout)        f32   per-tile [sum ; sum of squares]
    trs2, w_dim, c2 = conv_ref.shape
    trs = trs2 // 2
    wp = x_ref.shape[1]
    c3 = x_ref.shape[2]

    r0 = pl.multiple_of(pl.program_id(1) * trs, trs)
    xs = x_ref[pl.ds(r0, trs + 2), :, :]                      # (trs+2, Wp, 3*Cin)

    # Nearest x2 along rows, built once; the three ky taps are then
    # sublane-aligned windows of the flattened result (Wp is a multiple of 8).
    u = jnp.broadcast_to(xs[:, None], (trs + 2, 2, wp, c3))
    u = u.reshape((2 * trs + 4) * wp, c3)

    m = 2 * trs * wp
    acc = jnp.zeros((m, c2), jnp.float32)
    for ky in range(3):
        lhs = u[(1 + ky) * wp:(1 + ky) * wp + m, :]           # (2*trs*Wp, 3*Cin)
        acc = acc + jnp.dot(lhs, w_ref[ky],
                            preferred_element_type=jnp.float32)

    # Per-tile statistics; zero-padded columns contribute exactly zero.
    # TODO(synk): E[x^2]-E[x]^2 in f32 can lose precision when |mean| >> std;
    # a shifted / Welford-style combine would be more robust.
    stats_ref[0:1, :] = jnp.sum(acc, axis=0, keepdims=True)
    stats_ref[1:2, :] = jnp.sum(acc * acc, axis=0, keepdims=True)

    conv_ref[...] = acc.reshape(trs2, wp, c2)[:, :w_dim, :].astype(conv_ref.dtype)


# ---------------------------------------------------------------------------
# Pass 2: BatchNorm affine (scale/shift) + ReLU, flat halo-free blocking.
# ---------------------------------------------------------------------------
def _bn_relu_kernel(y_ref, scale_ref, shift_ref, o_ref):
    y = y_ref[...].astype(jnp.float32)
    s = scale_ref[...].reshape(1, 1, -1)
    b = shift_ref[...].reshape(1, 1, -1)
    o_ref[...] = jnp.maximum(y * s + b, 0.0).astype(o_ref.dtype)


def up_conv_forward(x, conv_w, conv_b, bn_gamma, bn_beta, *,
                    eps=1e-5, compute_dtype=jnp.bfloat16, row_tile=None):
    """up_conv forward: Upsample(x2 nearest) -> Conv3x3(pad=1) -> BN(train) -> ReLU.

    x: [N, Cin, H, W] f32 (NCHW).  Returns [N, Cout, 2H, 2W] f32 (NCHW).
    """
    N, Cin, H, W = x.shape
    Cout = conv_w.shape[0]
    H2, W2 = 2 * H, 2 * W
    Wp = _round_up(W, 8)          # sublane-align the source width (zero columns)
    C3 = 3 * Cin                  # pre-gathered horizontal taps
    C2 = 2 * Cout                 # output lanes = (column parity, channel)

    vmem_limit, budget = _vmem_budget()
    if row_tile is not None:
        assert H % row_tile == 0
        trs = row_tile
    else:
        trs = _pick_row_tile(N, H, Wp, W, C3, C2, budget)
    T = H // trs

    # ---- wrapper prep: only source-sized tensors, never the 4x upsample ----
    x_nhwc = jnp.transpose(x, (0, 2, 3, 1))
    xw = jnp.pad(x_nhwc, ((0, 0), (0, 0), (1, 1), (0, 0)))
    # Pre-gather the three horizontal taps into the channel axis: (N, H, W, 3*Cin).
    xcol = jnp.concatenate(
        [xw[:, :, 0:W], xw[:, :, 1:W + 1], xw[:, :, 2:W + 2]], axis=-1)
    # Zero-pad one halo row top/bottom, and the width up to a sublane multiple.
    xp3 = jnp.pad(xcol, ((0, 0), (1, 1), (0, Wp - W), (0, 0))).astype(compute_dtype)

    # Per-ky weights with the column-parity combination folded into the lanes:
    # w_r[ky, dc*Cin + ci, pw*Cout + co] = sum_kx w[co, ci, ky, kx] * C[pw, dc, kx].
    w_t = jnp.transpose(conv_w, (2, 3, 1, 0)).astype(jnp.float32)    # (ky,kx,Cin,Cout)
    cmat = jnp.array([[[1., 0., 0.], [0., 1., 1.], [0., 0., 0.]],
                      [[0., 0., 0.], [1., 1., 0.], [0., 0., 1.]]], jnp.float32)
    w_r = jnp.einsum('pcx,yxif->ycipf', cmat, w_t).reshape(3, C3, C2)
    w_r = w_r.astype(compute_dtype)
    # NOTE: conv_b is intentionally not applied -- training-mode BatchNorm right
    # after the conv subtracts the per-channel batch mean, cancelling it exactly.
    # (Running-stat updates, if tracked elsewhere, would be off by conv_b.)

    cparams = pltpu.CompilerParams(
        dimension_semantics=("parallel", "parallel"),
        vmem_limit_bytes=vmem_limit,
    )

    conv_bytes = N * H2 * W * C2 * 2
    cost1 = pl.CostEstimate(
        flops=2 * N * H2 * Wp * (3 * C3) * C2,
        transcendentals=0,
        bytes_accessed=int(xp3.size) * 2 + int(w_r.size) * 2
        + conv_bytes + N * T * 2 * C2 * 4,
    )

    conv_out, stats = pl.pallas_call(
        _upconv_conv_kernel,
        out_shape=(
            jax.ShapeDtypeStruct((N, H2, W, C2), jnp.bfloat16),
            jax.ShapeDtypeStruct((N, T, 2, C2), jnp.float32),
        ),
        grid_spec=pltpu.PrefetchScalarGridSpec(
            num_scalar_prefetch=0,
            grid=(N, T),
            in_specs=[
                # Full (small, pre-upsample) padded image: block index depends only
                # on n -> fetched once per batch element, reused across row tiles.
                pl.BlockSpec((None, H + 2, Wp, C3), lambda n, t: (n, 0, 0, 0)),
                pl.BlockSpec((3, C3, C2), lambda n, t: (0, 0, 0)),
            ],
            out_specs=(
                pl.BlockSpec((None, 2 * trs, W, C2), lambda n, t: (n, t, 0, 0)),
                pl.BlockSpec((None, None, 2, C2), lambda n, t: (n, t, 0, 0)),
            ),
        ),
        compiler_params=cparams,
        cost_estimate=cost1,
    )(xp3, w_r)

    # ---- tiny global reduction: batch statistics -> per-channel scale/shift ----
    count = N * H2 * W2
    ssum = jnp.sum(stats[:, :, 0, :], axis=(0, 1)).reshape(2, Cout).sum(axis=0)
    ssq = jnp.sum(stats[:, :, 1, :], axis=(0, 1)).reshape(2, Cout).sum(axis=0)
    mean = ssum / count
    var = jnp.maximum(ssq / count - mean * mean, 0.0)   # biased (training) variance
    scale_c = bn_gamma.astype(jnp.float32) * jax.lax.rsqrt(var + eps)
    shift_c = bn_beta.astype(jnp.float32) - mean * scale_c
    scale2 = jnp.tile(scale_c, 2).reshape(1, C2)        # lanes = (pw, channel)
    shift2 = jnp.tile(shift_c, 2).reshape(1, C2)

    # ---- pass 2: flat elementwise BN-affine + ReLU with its own blocking ----
    rb = _pick_pass2_rows(H2, W, C2, budget)
    T2 = H2 // rb
    cost2 = pl.CostEstimate(
        flops=3 * N * H2 * W * C2,
        transcendentals=0,
        bytes_accessed=conv_bytes + N * H2 * W * C2 * 4 + 2 * C2 * 4,
    )
    y = pl.pallas_call(
        _bn_relu_kernel,
        out_shape=jax.ShapeDtypeStruct((N, H2, W, C2), jnp.float32),
        grid_spec=pltpu.PrefetchScalarGridSpec(
            num_scalar_prefetch=0,
            grid=(N, T2),
            in_specs=[
                pl.BlockSpec((None, rb, W, C2), lambda n, t: (n, t, 0, 0)),
                pl.BlockSpec((1, C2), lambda n, t: (0, 0)),
                pl.BlockSpec((1, C2), lambda n, t: (0, 0)),
            ],
            out_specs=pl.BlockSpec((None, rb, W, C2), lambda n, t: (n, t, 0, 0)),
        ),
        compiler_params=cparams,
        cost_estimate=cost2,
    )(conv_out, scale2, shift2)

    # (N, 2H, W, 2*Cout) with lanes (pw, c) is memory-identical to NHWC (N, 2H, 2W, Cout).
    out = y.reshape(N, H2, W2, Cout)
    # TODO(synk): the final NHWC -> NCHW transpose is left to XLA; fusing it into
    # pass 2 would force non-lane-dense NCHW stores for the decoder's small widths.
    return jnp.transpose(out, (0, 3, 1, 2))


if __name__ == "__main__":
    # Small deterministic configuration consistent with the up_conv block.
    N, in_ch, out_ch, H, W = 2, 4, 8, 16, 16

    key = jax.random.PRNGKey(0)
    kx, kw, kb = jax.random.split(key, 3)

    x = jax.random.normal(kx, (N, in_ch, H, W), dtype=jnp.float32)
    conv_w = 0.1 * jax.random.normal(kw, (out_ch, in_ch, 3, 3), dtype=jnp.float32)
    conv_b = 0.01 * jax.random.normal(kb, (out_ch,), dtype=jnp.float32)
    bn_gamma = jnp.ones((out_ch,), dtype=jnp.float32)   # PyTorch BN default weight
    bn_beta = jnp.zeros((out_ch,), dtype=jnp.float32)   # PyTorch BN default bias

    # row_tile=8 -> 2 row tiles per image: exercises the tiled grid + multi-tile stats.
    fwd = jax.jit(functools.partial(up_conv_forward, row_tile=8))
    out = fwd(x, conv_w, conv_b, bn_gamma, bn_beta)
    jax.block_until_ready(out)

    assert out.shape == (N, out_ch, 2 * H, 2 * W), out.shape
    assert bool(jnp.all(out >= 0.0))  # ReLU output is non-negative

    # Pure-JAX f32 reference of the PyTorch up_conv semantics (training-mode BN).
    def reference(x, w, b, gamma, beta, eps=1e-5):
        xu = jnp.repeat(jnp.repeat(x, 2, axis=2), 2, axis=3)
        z = jax.lax.conv_general_dilated(
            xu, w, window_strides=(1, 1), padding=((1, 1), (1, 1)),
            dimension_numbers=("NCHW", "OIHW", "NCHW"))
        z = z + b.reshape(1, -1, 1, 1)
        mean = jnp.mean(z, axis=(0, 2, 3), keepdims=True)
        var = jnp.mean((z - mean) ** 2, axis=(0, 2, 3), keepdims=True)
        yy = (z - mean) * jax.lax.rsqrt(var + eps)
        yy = yy * gamma.reshape(1, -1, 1, 1) + beta.reshape(1, -1, 1, 1)
        return jnp.maximum(yy, 0.0)

    ref = reference(x, conv_w, conv_b, bn_gamma, bn_beta)
    max_err = float(jnp.max(jnp.abs(out - ref)))
    assert bool(jnp.allclose(out, ref, atol=6e-2, rtol=6e-2)), max_err

    print("KERNEL_OK")
</pallas_src>

<mosaic_0001>
module attributes {stable_mosaic.version = 11 : i64} {
  func.func @_upconv_conv_kernel(%arg0: i32, %arg1: i32, %arg2: memref<1x18x16x12xbf16, #tpu.memory_space<vmem>>, %arg3: memref<3x12x16xbf16, #tpu.memory_space<vmem>>, %arg4: memref<1x16x16x16xbf16, #tpu.memory_space<vmem>>, %arg5: memref<1x1x2x16xf32, #tpu.memory_space<vmem>>) attributes {dimension_semantics = [#tpu.dimension_semantics<parallel>, #tpu.dimension_semantics<parallel>], iteration_bounds = array<i64: 2, 2>, scalar_prefetch = 0 : i64, scratch_operands = 0 : i64, tpu.core_type = #tpu.core_type<tc>, window_params = [{transform_indices = @transform_0, window_bounds = array<i64: 1, 18, 16, 12>}, {pipeline_mode = #tpu.pipeline_mode<synchronous>, transform_indices = @transform_1, window_bounds = array<i64: 3, 12, 16>}, {transform_indices = @transform_2, window_bounds = array<i64: 1, 16, 16, 16>}, {transform_indices = @transform_3, window_bounds = array<i64: 1, 1, 2, 16>}]} {
    %c8_i32 = arith.constant 8 : i32
    %0 = arith.muli %arg1, %c8_i32 : i32
    %1 = tpu.assume_multiple %0, 8 : i32
    %c0 = arith.constant 0 : index
    %2 = arith.index_cast %1 : i32 to index
    %c0_0 = arith.constant 0 : index
    %c0_1 = arith.constant 0 : index
    %3 = vector.load %arg2[%c0, %2, %c0_0, %c0_1] : memref<1x18x16x12xbf16, #tpu.memory_space<vmem>>, vector<1x10x16x12xbf16>
    %4 = vector.shape_cast %3 : vector<1x10x16x12xbf16> to vector<10x16x12xbf16>
    %5 = vector.shape_cast %4 : vector<10x16x12xbf16> to vector<10x1x16x12xbf16>
    %6 = vector.shape_cast %5 : vector<10x1x16x12xbf16> to vector<10x1x16x12xbf16>
    %7 = vector.broadcast %6 : vector<10x1x16x12xbf16> to vector<10x2x16x12xbf16>
    %8 = vector.shape_cast %7 : vector<10x2x16x12xbf16> to vector<320x12xbf16>
    %cst = arith.constant 0.000000e+00 : f32
    %9 = vector.broadcast %cst : f32 to vector<256x16xf32>
    %10 = vector.extract_strided_slice %8 {offsets = [16, 0], sizes = [256, 12], strides = [1, 1]} : vector<320x12xbf16> to vector<256x12xbf16>
    %c0_2 = arith.constant 0 : index
    %c0_3 = arith.constant 0 : index
    %c0_4 = arith.constant 0 : index
    %11 = vector.load %arg3[%c0_2, %c0_3, %c0_4] : memref<3x12x16xbf16, #tpu.memory_space<vmem>>, vector<1x12x16xbf16>
    %12 = vector.shape_cast %11 : vector<1x12x16xbf16> to vector<12x16xbf16>
    %cst_5 = arith.constant dense<0.000000e+00> : vector<256x16xf32>
    %13 = tpu.matmul %10, %12, %cst_5 {dimension_numbers = #tpu.dot_dimension_numbers<[1], [0], [0], [1], [0, 0, 1, 1], [], []>} : vector<256x12xbf16>, vector<12x16xbf16>, vector<256x16xf32> -> vector<256x16xf32>
    %14 = arith.addf %9, %13 : vector<256x16xf32>
    %15 = vector.extract_strided_slice %8 {offsets = [32, 0], sizes = [256, 12], strides = [1, 1]} : vector<320x12xbf16> to vector<256x12xbf16>
    %c1 = arith.constant 1 : index
    %c0_6 = arith.constant 0 : index
    %c0_7 = arith.constant 0 : index
    %16 = vector.load %arg3[%c1, %c0_6, %c0_7] : memref<3x12x16xbf16, #tpu.memory_space<vmem>>, vector<1x12x16xbf16>
    %17 = vector.shape_cast %16 : vector<1x12x16xbf16> to vector<12x16xbf16>
    %cst_8 = arith.constant dense<0.000000e+00> : vector<256x16xf32>
    %18 = tpu.matmul %15, %17, %cst_8 {dimension_numbers = #tpu.dot_dimension_numbers<[1], [0], [0], [1], [0, 0, 1, 1], [], []>} : vector<256x12xbf16>, vector<12x16xbf16>, vector<256x16xf32> -> vector<256x16xf32>
    %19 = arith.addf %14, %18 : vector<256x16xf32>
    %20 = vector.extract_strided_slice %8 {offsets = [48, 0], sizes = [256, 12], strides = [1, 1]} : vector<320x12xbf16> to vector<256x12xbf16>
    %c2 = arith.constant 2 : index
    %c0_9 = arith.constant 0 : index
    %c0_10 = arith.constant 0 : index
    %21 = vector.load %arg3[%c2, %c0_9, %c0_10] : memref<3x12x16xbf16, #tpu.memory_space<vmem>>, vector<1x12x16xbf16>
    %22 = vector.shape_cast %21 : vector<1x12x16xbf16> to vector<12x16xbf16>
    %cst_11 = arith.constant dense<0.000000e+00> : vector<256x16xf32>
    %23 = tpu.matmul %20, %22, %cst_11 {dimension_numbers = #tpu.dot_dimension_numbers<[1], [0], [0], [1], [0, 0, 1, 1], [], []>} : vector<256x12xbf16>, vector<12x16xbf16>, vector<256x16xf32> -> vector<256x16xf32>
    %24 = arith.addf %19, %23 : vector<256x16xf32>
    %cst_12 = arith.constant dense<0.000000e+00> : vector<16xf32>
    %25 = vector.multi_reduction <add>, %24, %cst_12 [0] : vector<256x16xf32> to vector<16xf32>
    %26 = vector.shape_cast %25 : vector<16xf32> to vector<1x16xf32>
    %c0_13 = arith.constant 0 : index
    %c0_14 = arith.constant 0 : index
    %c0_15 = arith.constant 0 : index
    %c0_16 = arith.constant 0 : index
    %27 = vector.load %arg5[%c0_13, %c0_14, %c0_15, %c0_16] : memref<1x1x2x16xf32, #tpu.memory_space<vmem>>, vector<1x1x1x16xf32>
    %28 = vector.shape_cast %27 : vector<1x1x1x16xf32> to vector<1x16xf32>
    %29 = vector.shape_cast %26 : vector<1x16xf32> to vector<1x1x1x16xf32>
    tpu.vector_store %arg5[%c0_13, %c0_14, %c0_15, %c0_16], %29 {strides = array<i32>} : memref<1x1x2x16xf32, #tpu.memory_space<vmem>>, vector<1x1x1x16xf32>,
    %30 = arith.mulf %24, %24 : vector<256x16xf32>
    %cst_17 = arith.constant dense<0.000000e+00> : vector<16xf32>
    %31 = vector.multi_reduction <add>, %30, %cst_17 [0] : vector<256x16xf32> to vector<16xf32>
    %32 = vector.shape_cast %31 : vector<16xf32> to vector<1x16xf32>
    %c0_18 = arith.constant 0 : index
    %c0_19 = arith.constant 0 : index
    %c1_20 = arith.constant 1 : index
    %c0_21 = arith.constant 0 : index
    %33 = vector.load %arg5[%c0_18, %c0_19, %c1_20, %c0_21] : memref<1x1x2x16xf32, #tpu.memory_space<vmem>>, vector<1x1x1x16xf32>
    %34 = vector.shape_cast %33 : vector<1x1x1x16xf32> to vector<1x16xf32>
    %35 = vector.shape_cast %32 : vector<1x16xf32> to vector<1x1x1x16xf32>
    tpu.vector_store %arg5[%c0_18, %c0_19, %c1_20, %c0_21], %35 {strides = array<i32>} : memref<1x1x2x16xf32, #tpu.memory_space<vmem>>, vector<1x1x1x16xf32>,
    %36 = vector.shape_cast %24 : vector<256x16xf32> to vector<16x16x16xf32>
    %37 = arith.truncf %36 : vector<16x16x16xf32> to vector<16x16x16xbf16>
    %c0_22 = arith.constant 0 : index
    %c0_23 = arith.constant 0 : index
    %c0_24 = arith.constant 0 : index
    %c0_25 = arith.constant 0 : index
    %38 = vector.load %arg4[%c0_22, %c0_23, %c0_24, %c0_25] : memref<1x16x16x16xbf16, #tpu.memory_space<vmem>>, vector<1x16x16x16xbf16>
    %39 = vector.shape_cast %38 : vector<1x16x16x16xbf16> to vector<16x16x16xbf16>
    %40 = vector.shape_cast %37 : vector<16x16x16xbf16> to vector<1x16x16x16xbf16>
    tpu.vector_store %arg4[%c0_22, %c0_23, %c0_24, %c0_25], %40 {strides = array<i32>} : memref<1x16x16x16xbf16, #tpu.memory_space<vmem>>, vector<1x16x16x16xbf16>,
    return
  }
  func.func @transform_0(%arg0: i32, %arg1: i32) -> (i32, i32, i32, i32) {
    %c0_i32 = arith.constant 0 : i32
    %c0_i32_0 = arith.constant 0 : i32
    %c0_i32_1 = arith.constant 0 : i32
    %c0_i32_2 = arith.constant 0 : i32
    return %arg0, %c0_i32, %c0_i32_0, %c0_i32_1 : i32, i32, i32, i32
  }
  func.func @transform_1(%arg0: i32, %arg1: i32) -> (i32, i32, i32) {
    %c0_i32 = arith.constant 0 : i32
    %c0_i32_0 = arith.constant 0 : i32
    %c0_i32_1 = arith.constant 0 : i32
    %c0_i32_2 = arith.constant 0 : i32
    return %c0_i32, %c0_i32_0, %c0_i32_1 : i32, i32, i32
  }
  func.func @transform_2(%arg0: i32, %arg1: i32) -> (i32, i32, i32, i32) {
    %c0_i32 = arith.constant 0 : i32
    %c0_i32_0 = arith.constant 0 : i32
    %c0_i32_1 = arith.constant 0 : i32
    return %arg0, %arg1, %c0_i32, %c0_i32_0 : i32, i32, i32, i32
  }
  func.func @transform_3(%arg0: i32, %arg1: i32) -> (i32, i32, i32, i32) {
    %c0_i32 = arith.constant 0 : i32
    %c0_i32_0 = arith.constant 0 : i32
    %c0_i32_1 = arith.constant 0 : i32
    return %arg0, %arg1, %c0_i32, %c0_i32_0 : i32, i32, i32, i32
  }
}

module attributes {stable_mosaic.version = 11 : i64} {
  func.func @_bn_relu_kernel(%arg0: i32, %arg1: i32, %arg2: memref<1x32x16x16xbf16, #tpu.memory_space<vmem>>, %arg3: memref<1x16xf32, #tpu.memory_space<vmem>>, %arg4: memref<1x16xf32, #tpu.memory_space<vmem>>, %arg5: memref<1x32x16x16xf32, #tpu.memory_space<vmem>>) attributes {dimension_semantics = [#tpu.dimension_semantics<parallel>, #tpu.dimension_semantics<parallel>], iteration_bounds = array<i64: 2, 1>, scalar_prefetch = 0 : i64, scratch_operands = 0 : i64, tpu.core_type = #tpu.core_type<tc>, window_params = [{transform_indices = @transform_0, window_bounds = array<i64: 1, 32, 16, 16>}, {pipeline_mode = #tpu.pipeline_mode<synchronous>, transform_indices = @transform_1, window_bounds = array<i64: 1, 16>}, {pipeline_mode = #tpu.pipeline_mode<synchronous>, transform_indices = @transform_2, window_bounds = array<i64: 1, 16>}, {transform_indices = @transform_3, window_bounds = array<i64: 1, 32, 16, 16>}]} {
    %c0 = arith.constant 0 : index
    %c0_0 = arith.constant 0 : index
    %c0_1 = arith.constant 0 : index
    %c0_2 = arith.constant 0 : index
    %0 = vector.load %arg2[%c0, %c0_0, %c0_1, %c0_2] : memref<1x32x16x16xbf16, #tpu.memory_space<vmem>>, vector<1x32x16x16xbf16>
    %1 = vector.shape_cast %0 : vector<1x32x16x16xbf16> to vector<32x16x16xbf16>
    %2 = arith.extf %1 : vector<32x16x16xbf16> to vector<32x16x16xf32>
    %c0_3 = arith.constant 0 : index
    %c0_4 = arith.constant 0 : index
    %3 = vector.load %arg3[%c0_3, %c0_4] : memref<1x16xf32, #tpu.memory_space<vmem>>, vector<1x16xf32>
    %4 = vector.shape_cast %3 : vector<1x16xf32> to vector<1x1x16xf32>
    %c0_5 = arith.constant 0 : index
    %c0_6 = arith.constant 0 : index
    %5 = vector.load %arg4[%c0_5, %c0_6] : memref<1x16xf32, #tpu.memory_space<vmem>>, vector<1x16xf32>
    %6 = vector.shape_cast %5 : vector<1x16xf32> to vector<1x1x16xf32>
    %7 = vector.broadcast %4 : vector<1x1x16xf32> to vector<32x16x16xf32>
    %8 = arith.mulf %2, %7 : vector<32x16x16xf32>
    %9 = vector.broadcast %6 : vector<1x1x16xf32> to vector<32x16x16xf32>
    %10 = arith.addf %8, %9 : vector<32x16x16xf32>
    %cst = arith.constant 0.000000e+00 : f32
    %11 = vector.broadcast %cst : f32 to vector<32x16x16xf32>
    %12 = arith.maximumf %10, %11 : vector<32x16x16xf32>
    %c0_7 = arith.constant 0 : index
    %c0_8 = arith.constant 0 : index
    %c0_9 = arith.constant 0 : index
    %c0_10 = arith.constant 0 : index
    %13 = vector.load %arg5[%c0_7, %c0_8, %c0_9, %c0_10] : memref<1x32x16x16xf32, #tpu.memory_space<vmem>>, vector<1x32x16x16xf32>
    %14 = vector.shape_cast %13 : vector<1x32x16x16xf32> to vector<32x16x16xf32>
    %15 = vector.shape_cast %12 : vector<32x16x16xf32> to vector<1x32x16x16xf32>
    tpu.vector_store %arg5[%c0_7, %c0_8, %c0_9, %c0_10], %15 {strides = array<i32>} : memref<1x32x16x16xf32, #tpu.memory_space<vmem>>, vector<1x32x16x16xf32>,
    return
  }
  func.func @transform_0(%arg0: i32, %arg1: i32) -> (i32, i32, i32, i32) {
    %c0_i32 = arith.constant 0 : i32
    %c0_i32_0 = arith.constant 0 : i32
    %c0_i32_1 = arith.constant 0 : i32
    return %arg0, %arg1, %c0_i32, %c0_i32_0 : i32, i32, i32, i32
  }
  func.func @transform_1(%arg0: i32, %arg1: i32) -> (i32, i32) {
    %c0_i32 = arith.constant 0 : i32
    %c0_i32_0 = arith.constant 0 : i32
    %c0_i32_1 = arith.constant 0 : i32
    return %c0_i32, %c0_i32_0 : i32, i32
  }
  func.func @transform_2(%arg0: i32, %arg1: i32) -> (i32, i32) {
    %c0_i32 = arith.constant 0 : i32
    %c0_i32_0 = arith.constant 0 : i32
    %c0_i32_1 = arith.constant 0 : i32
    return %c0_i32, %c0_i32_0 : i32, i32
  }
  func.func @transform_3(%arg0: i32, %arg1: i32) -> (i32, i32, i32, i32) {
    %c0_i32 = arith.constant 0 : i32
    %c0_i32_0 = arith.constant 0 : i32
    %c0_i32_1 = arith.constant 0 : i32
    return %arg0, %arg1, %c0_i32, %c0_i32_0 : i32, i32, i32, i32
  }
}

</mosaic_0001>

<llo_original>
// kernel: tile.18
$region0: #{tile.18}
  #allocation0 [shape = 's32[1]{0}', space=sflag, size = 0x4, scoped, tag = 'scoped memory for tile.18']
  %s0 = inlined_call_operand.vmem [shape: f32[8], index: 0, kind: input, shape index: {}]
  %s1 = inlined_call_operand.vmem [shape: f32[2,8], index: 1, kind: output, shape index: {}]
  // Predicated region
  $region2: #{tile.18} parent=0 // pred_check
    _
  $region3: #{tile.18} parent=0 // pred_check_branch
    %3 = sbr.rel (0) target = $region5
  $region4: #{tile.18} parent=0 // pred_region
    _
  $region5: #{tile.18} parent=0 // pred_fallthru
    _
  %v4 = vld [vmem:[%s0] ss:$0 sm:$0xff]
  %5 = vst [vmem:[%s1] sm:$0x3] %v4

// kernel: tile.19
$region0: #{tile.19}
  %s0 = inlined_call_operand.vmem [shape: f32[2,8], index: 0, kind: input, shape index: {}]
  %s1 = inlined_call_operand.vmem [shape: f32[1,16], index: 1, kind: output, shape index: {}]
  $region1: #{tile.19} parent=0
    #allocation0 [shape = 'u8[4096]{0}', space=vmem, size = 0x1000, scoped, tag = 'scoped mem for output reshape']
    #allocation1 [shape = 'u8[4096]{0}', space=vmem, size = 0x1000, scoped, tag = 'scoped mem for input reshape']
    %s3 = sshllo.u32 0, 2
    %v4 = vld [vmem:[%s0] sm:%s3]
    %5 = vst [vmem:[#allocation1] sm:%s3] %v4
    %v6 = vld [vmem:[#allocation1] sm:$0x1]
    %vm7 = vcmask 64512
    %8 = vst.msk [vmem:[#allocation0] sm:$0x1] %vm7, %v6
    %s9 = scalar_lea.vmem [#allocation1], 1
    %v10 = vld [vmem:[%s9] sm:$0x1]
    %11 = vrot.lane.b32.xlu0 %v10, 8
    %v12 = vpop.permute.xlu0 %11
    %vm13 = vcmask 130112
    %14 = vst.msk [vmem:[#allocation0] sm:$0x1] %vm13, %v12
    %s16 = sshllo.u32 0, 1
    %v18 = vld [vmem:[#allocation0] sm:%s16]
    %s19 = sshllo.u32 0, 1
    %20 = vst [vmem:[%s1] sm:%s19] %v18

// kernel: up_conv_forward.3
$region0: #{up_conv_forward.3}
  #allocation0 [shape = 'u32[]', space=smem, size = 0x4, offset = 0x4, fixed_abs, tag = 'smem constant byte address 0x4 - core index']
  #allocation1 [shape = 'u32[144,128]{1,0:T(1,128)}', space=vmem, size = 0x12000, scoped, tag = 'internal scratch']
  %s0 = inlined_call_operand.vmem [shape: bf16[2,32,16,16], index: 0, kind: input, shape index: {}]
  %s1 = inlined_call_operand.vmem [shape: f32[1,16], index: 1, kind: input, shape index: {}]
  %s2 = inlined_call_operand.vmem [shape: f32[1,16], index: 2, kind: input, shape index: {}]
  %s3 = inlined_call_operand.vmem [shape: f32[2,32,16,16], index: 3, kind: output, shape index: {}]
  %s4 = sld [smem:[#allocation0]]
  $region45: #{up_conv_forward.3} parent=0
    _
  %s6 = ssub.s32 1, %s4
  %s7 = scalar_select 0, %s6, %s4
  loop: start=0, step=1, limit=4
  $region2: #{up_conv_forward.3} parent=0 // loop_pre_header
    _
  $region3: #{up_conv_forward.3} parent=0 // loop_header
    %s9 = sphi 0, %s13
    %p10 = scmp.ge.s32.totalorder %s9, 4
    %s16 = sphi 0, %s28
    %s17 = sphi 0, %s24
    %s18 = sphi 0, %s16
    %s19 = sphi 0, %s17
    %s20 = sphi 0, %s18
    %s21 = sphi 0, %s19
    %s33 = sphi 0, %s35
    %s36 = sphi 0, %s33
    %s37 = sphi 0, %s36
    %s53 = sphi 0, %s37
    %s57 = sphi 0, %s57
    %s59 = sphi 0, %s57
    %s60 = sphi 0, %s59
    %s74 = sphi 0, %s60
    %s78 = sphi 0, %s78
    %s80 = sphi 0, %s78
    %s81 = sphi 0, %s80
    %s95 = sphi 0, %s81
    %s103 = sphi 0, %s105
    %s106 = sphi 0, %s103
    %s107 = sphi 0, %s106
    %s123 = sphi 0, %s107
  $region4: #{up_conv_forward.3} parent=0 // loop_header_branch
    %12 = sbr.rel (%p10) target = $region8
  $region5: #{up_conv_forward.3} parent=0 // loop_body
    %s14 = ssub.s32 %s9, 1
    %s15 = ssub.s32 %s9, 2
    %s22 = sadd.s32 1, %s17
    %p23 = scmp.ge.s32.totalorder %s22, 1
    %s24 = scalar_select %p23, 0, %s22
    %s25 = sadd.s32 1, %s16
    %s26 = scalar_select %p23, %s25, %s16
    %p27 = scmp.ge.s32.totalorder %s26, 2
    %s28 = scalar_select %p27, 0, %s26
    %s29 = ssub.s32 %s16, %s28
    %s30 = ssub.s32 %s17, %s24
    %s31 = sor.u32 %s29, %s30
    %p32 = scmp.eq.s32.totalorder %s31, 0
    %s34 = sadd.s32 %s33, 1
    %s35 = scalar_select %p32, %s33, %s34
    %p38 = pneg %p32
    %p39 = scmp.eq.s32.totalorder %s9, 1
    %p40 = por %p38, %p39
    %p41 = scmp.ne.s32.totalorder %s33, %s36
    %p42 = scmp.eq.s32.totalorder %s9, 0
    %p43 = por %p41, %p42
    %p44 = scmp.ne.s32.totalorder %s33, %s36
    %p45 = scmp.eq.s32.totalorder %s14, 1
    %p46 = por %p44, %p45
    %p47 = scmp.ne.s32.totalorder %s36, %s37
    %p48 = scmp.eq.s32.totalorder %s14, 0
    %p49 = por %p47, %p48
    %p50 = scmp.ne.s32.totalorder %s36, %s37
    %p51 = scmp.eq.s32.totalorder %s15, 1
    %p52 = por %p50, %p51
    %p54 = scmp.ne.s32.totalorder %s37, %s53
    %p55 = scmp.eq.s32.totalorder %s15, 0
    %p56 = por %p54, %p55
    %s58 = sadd.s32 %s57, 1
    %p61 = scmp.eq.s32.totalorder %s9, 1
    %p62 = scmp.ne.s32.totalorder %s57, %s59
    %p63 = scmp.eq.s32.totalorder %s9, 0
    %p64 = por %p62, %p63
    %p65 = scmp.ne.s32.totalorder %s57, %s59
    %p66 = scmp.eq.s32.totalorder %s14, 1
    %p67 = por %p65, %p66
    %p68 = scmp.ne.s32.totalorder %s59, %s60
    %p69 = scmp.eq.s32.totalorder %s14, 0
    %p70 = por %p68, %p69
    %p71 = scmp.ne.s32.totalorder %s59, %s60
    %p72 = scmp.eq.s32.totalorder %s15, 1
    %p73 = por %p71, %p72
    %p75 = scmp.ne.s32.totalorder %s60, %s74
    %p76 = scmp.eq.s32.totalorder %s15, 0
    %p77 = por %p75, %p76
    %s79 = sadd.s32 %s78, 1
    %p82 = scmp.eq.s32.totalorder %s9, 1
    %p83 = scmp.ne.s32.totalorder %s78, %s80
    %p84 = scmp.eq.s32.totalorder %s9, 0
    %p85 = por %p83, %p84
    %p86 = scmp.ne.s32.totalorder %s78, %s80
    %p87 = scmp.eq.s32.totalorder %s14, 1
    %p88 = por %p86, %p87
    %p89 = scmp.ne.s32.totalorder %s80, %s81
    %p90 = scmp.eq.s32.totalorder %s14, 0
    %p91 = por %p89, %p90
    %p92 = scmp.ne.s32.totalorder %s80, %s81
    %p93 = scmp.eq.s32.totalorder %s15, 1
    %p94 = por %p92, %p93
    %p96 = scmp.ne.s32.totalorder %s81, %s95
    %p97 = scmp.eq.s32.totalorder %s15, 0
    %p98 = por %p96, %p97
    %s99 = ssub.s32 %s16, %s28
    %s100 = ssub.s32 %s17, %s24
    %s101 = sor.u32 %s99, %s100
    %p102 = scmp.eq.s32.totalorder %s101, 0
    %s104 = sadd.s32 %s103, 1
    %s105 = scalar_select %p102, %s103, %s104
    %p108 = pneg %p102
    %p109 = scmp.eq.s32.totalorder %s9, 1
    %p110 = por %p108, %p109
    %p111 = scmp.ne.s32.totalorder %s103, %s106
    %p112 = scmp.eq.s32.totalorder %s9, 0
    %p113 = por %p111, %p112
    %p114 = scmp.ne.s32.totalorder %s103, %s106
    %p115 = scmp.eq.s32.totalorder %s14, 1
    %p116 = por %p114, %p115
    %p117 = scmp.ne.s32.totalorder %s106, %s107
    %p118 = scmp.eq.s32.totalorder %s14, 0
    %p119 = por %p117, %p118
    %p120 = scmp.ne.s32.totalorder %s106, %s107
    %p121 = scmp.eq.s32.totalorder %s15, 1
    %p122 = por %p120, %p121
    %p124 = scmp.ne.s32.totalorder %s107, %s123
    %p125 = scmp.eq.s32.totalorder %s15, 0
    %p126 = por %p124, %p125
    %p127 = scmp.le.s32.totalorder 1, %s9
    %p128 = scmp.lt.s32.totalorder %s9, 3
    %p129 = pnand %p127, %p128
    %p130 = pneg %p129
    // Predicated region
    $region9: #{up_conv_forward.3} parent=5 // pred_check
      _
    $region10: #{up_conv_forward.3} parent=5 // pred_check_branch
      %132 = sbr.rel (%p129) target = $region12
    $region11: #{up_conv_forward.3} parent=5 // pred_region
      %s133 = ssub.s32 %s9, 1
      // Predicated region
      $region13: #{up_conv_forward.3} parent=11 // pred_check
        %p134 = pneg %p70
      $region14: #{up_conv_forward.3} parent=11 // pred_check_branch
        %136 = sbr.rel (%p134) target = $region16
      $region15: #{up_conv_forward.3} parent=11 // pred_region
        _
      $region16: #{up_conv_forward.3} parent=11 // pred_fallthru
        _
      // Predicated region
      $region17: #{up_conv_forward.3} parent=11 // pred_check
        %p137 = pneg %p91
      $region18: #{up_conv_forward.3} parent=11 // pred_check_branch
        %139 = sbr.rel (%p137) target = $region20
      $region19: #{up_conv_forward.3} parent=11 // pred_region
        _
      $region20: #{up_conv_forward.3} parent=11 // pred_fallthru
        _
    $region12: #{up_conv_forward.3} parent=5 // pred_fallthru
      _
    %p140 = scmp.lt.s32.totalorder %s9, 2
    // Predicated region
    $region21: #{up_conv_forward.3} parent=5 // pred_check
      %p141 = pneg %p140
    $region22: #{up_conv_forward.3} parent=5 // pred_check_branch
      %143 = sbr.rel (%p141) target = $region24
    $region23: #{up_conv_forward.3} parent=5 // pred_region
      // Predicated region
      $region25: #{up_conv_forward.3} parent=23 // pred_check
        %p144 = pneg %p43
      $region26: #{up_conv_forward.3} parent=23 // pred_check_branch
        %146 = sbr.rel (%p144) target = $region28
      $region27: #{up_conv_forward.3} parent=23 // pred_region
        %s147 = smul.u32 32, %s17
        %p148 = scmp.lt.s32.totalorder %s16, 1
        %s149 = scalar_select %p148, %s16, 1
        %p150 = scmp.lt.s32.totalorder %s147, 31
        %s151 = scalar_select %p150, %s147, 31
        %s152 = smul.addr %s151, 2
        %s153 = smul.addr %s149, 64
        %s154 = sadd.s32 %s152, %s153
        %s155 = smul.addr %s154, 4
        %s156 = scalar_lea.vmem %s0, %s155
        %s157 = smul.u32 32, %s17
      $region28: #{up_conv_forward.3} parent=23 // pred_fallthru
        _
    $region24: #{up_conv_forward.3} parent=5 // pred_fallthru
      _
    %p158 = scmp.le.s32.totalorder 1, %s9
    %p159 = scmp.lt.s32.totalorder %s9, 3
    %p160 = pnand %p158, %p159
    %p161 = pneg %p160
    // Predicated region
    $region29: #{up_conv_forward.3} parent=5 // pred_check
      _
    $region30: #{up_conv_forward.3} parent=5 // pred_check_branch
      %163 = sbr.rel (%p160) target = $region32
    $region31: #{up_conv_forward.3} parent=5 // pred_region
      %s164 = ssub.s32 %s9, 1
      %s165 = smul.u32 32, %s19
      %p166 = scmp.lt.s32.totalorder %s18, 1
      %s167 = scalar_select %p166, %s18, 1
      %p168 = scmp.lt.s32.totalorder %s165, 31
      %s169 = scalar_select %p168, %s165, 31
      %s170 = smul.addr %s169, 2
      %s171 = smul.addr %s167, 64
      %s172 = sadd.s32 %s170, %s171
      %s173 = smul.addr %s172, 4
      %s174 = scalar_lea.vmem %s0, %s173
      %p175 = pneg %p49
      %p176 = pneg %p46
      %p177 = pneg %p70
      %p178 = pneg %p67
      %p179 = pneg %p91
      %p180 = pneg %p88
      %p181 = pneg %p119
      %p182 = pneg %p116
      %s183 = smul.u32 32, %s19
      %p184 = scmp.lt.s32.totalorder %s18, 1
      %s185 = scalar_select %p184, %s18, 1
      %p186 = scmp.lt.s32.totalorder %s183, 31
      %s187 = scalar_select %p186, %s183, 31
      %s188 = smul.addr %s187, 2
      %s189 = smul.addr %s185, 64
      %s190 = sadd.s32 %s188, %s189
      %s191 = smul.addr %s190, 8
      %s192 = scalar_lea.vmem %s3, %s191
      %s193 = smul.u32 32, %s19
      %p194 = scmp.lt.s32.totalorder %s18, 1
      %s195 = scalar_select %p194, %s18, 1
      %p196 = scmp.lt.s32.totalorder %s193, 31
      %s197 = scalar_select %p196, %s193, 31
      %s198 = smul.addr %s197, 2
      %s199 = smul.addr %s195, 64
      %s200 = sadd.s32 %s198, %s199
      %s201 = smul.addr %s200, 4
      %s202 = scalar_lea.vmem %s0, %s201
      %s203 = smul.u32 32, %s19
      %s204 = smul.u32 32, %s19
      %p205 = scmp.lt.s32.totalorder %s18, 1
      %s206 = scalar_select %p205, %s18, 1
      %p207 = scmp.lt.s32.totalorder %s204, 31
      %s208 = scalar_select %p207, %s204, 31
      %s209 = smul.addr %s208, 2
      %s210 = smul.addr %s206, 64
      %s211 = sadd.s32 %s209, %s210
      %s212 = smul.addr %s211, 8
      %s213 = scalar_lea.vmem %s3, %s212
      %s214 = smul.u32 32, %s19
      %v215 = vld [vmem:[%s202] sm:$0xf]
      %v216 = vld [vmem:[%s202 + $0x4] sm:$0xf]
      %v217 = vld [vmem:[%s202 + $0x8] sm:$0xf]
      %v218 = vld [vmem:[%s202 + $0xc] sm:$0xf]
      %v219 = vld [vmem:[%s202 + $0x10] sm:$0xf]
      %v220 = vld [vmem:[%s202 + $0x14] sm:$0xf]
      %v221 = vld [vmem:[%s202 + $0x18] sm:$0xf]
      %v222 = vld [vmem:[%s202 + $0x1c] sm:$0xf]
      %v223 = vld [vmem:[%s202 + $0x20] sm:$0xf]
      %v224 = vld [vmem:[%s202 + $0x24] sm:$0xf]
      %v225 = vld [vmem:[%s202 + $0x28] sm:$0xf]
      %v226 = vld [vmem:[%s202 + $0x2c] sm:$0xf]
      %v227 = vld [vmem:[%s202 + $0x30] sm:$0xf]
      %v228 = vld [vmem:[%s202 + $0x34] sm:$0xf]
      %v229 = vld [vmem:[%s202 + $0x38] sm:$0xf]
      %v230 = vld [vmem:[%s202 + $0x3c] sm:$0xf]
      %v231 = vld [vmem:[%s202 + $0x40] sm:$0xf]
      %v232 = vld [vmem:[%s202 + $0x44] sm:$0xf]
      %v233 = vld [vmem:[%s202 + $0x48] sm:$0xf]
      %v234 = vld [vmem:[%s202 + $0x4c] sm:$0xf]
      %v235 = vld [vmem:[%s202 + $0x50] sm:$0xf]
      %v236 = vld [vmem:[%s202 + $0x54] sm:$0xf]
      %v237 = vld [vmem:[%s202 + $0x58] sm:$0xf]
      %v238 = vld [vmem:[%s202 + $0x5c] sm:$0xf]
      %v239 = vld [vmem:[%s202 + $0x60] sm:$0xf]
      %v240 = vld [vmem:[%s202 + $0x64] sm:$0xf]
      %v241 = vld [vmem:[%s202 + $0x68] sm:$0xf]
      %v242 = vld [vmem:[%s202 + $0x6c] sm:$0xf]
      %v243 = vld [vmem:[%s202 + $0x70] sm:$0xf]
      %v244 = vld [vmem:[%s202 + $0x74] sm:$0xf]
      %v245 = vld [vmem:[%s202 + $0x78] sm:$0xf]
      %v246 = vld [vmem:[%s202 + $0x7c] sm:$0xf]
      %v247 = vld [vmem:[%s202 + $0x80] sm:$0xf]
      %v248 = vld [vmem:[%s202 + $0x84] sm:$0xf]
      %v249 = vld [vmem:[%s202 + $0x88] sm:$0xf]
      %v250 = vld [vmem:[%s202 + $0x8c] sm:$0xf]
      %v251 = vld [vmem:[%s202 + $0x90] sm:$0xf]
      %v252 = vld [vmem:[%s202 + $0x94] sm:$0xf]
      %v253 = vld [vmem:[%s202 + $0x98] sm:$0xf]
      %v254 = vld [vmem:[%s202 + $0x9c] sm:$0xf]
      %v255 = vld [vmem:[%s202 + $0xa0] sm:$0xf]
      %v256 = vld [vmem:[%s202 + $0xa4] sm:$0xf]
      %v257 = vld [vmem:[%s202 + $0xa8] sm:$0xf]
      %v258 = vld [vmem:[%s202 + $0xac] sm:$0xf]
      %v259 = vld [vmem:[%s202 + $0xb0] sm:$0xf]
      %v260 = vld [vmem:[%s202 + $0xb4] sm:$0xf]
      %v261 = vld [vmem:[%s202 + $0xb8] sm:$0xf]
      %v262 = vld [vmem:[%s202 + $0xbc] sm:$0xf]
      %v263 = vld [vmem:[%s202 + $0xc0] sm:$0xf]
      %v264 = vld [vmem:[%s202 + $0xc4] sm:$0xf]
      %v265 = vld [vmem:[%s202 + $0xc8] sm:$0xf]
      %v266 = vld [vmem:[%s202 + $0xcc] sm:$0xf]
      %v267 = vld [vmem:[%s202 + $0xd0] sm:$0xf]
      %v268 = vld [vmem:[%s202 + $0xd4] sm:$0xf]
      %v269 = vld [vmem:[%s202 + $0xd8] sm:$0xf]
      %v270 = vld [vmem:[%s202 + $0xdc] sm:$0xf]
      %v271 = vld [vmem:[%s202 + $0xe0] sm:$0xf]
      %v272 = vld [vmem:[%s202 + $0xe4] sm:$0xf]
      %v273 = vld [vmem:[%s202 + $0xe8] sm:$0xf]
      %v274 = vld [vmem:[%s202 + $0xec] sm:$0xf]
      %v275 = vld [vmem:[%s202 + $0xf0] sm:$0xf]
      %v276 = vld [vmem:[%s202 + $0xf4] sm:$0xf]
      %v277 = vld [vmem:[%s202 + $0xf8] sm:$0xf]
      %v278 = vld [vmem:[%s202 + $0xfc] sm:$0xf]
      %v279 = vunpack.c.l.bf16 %v215
      %v280 = vunpack.c.l.bf16 %v216
      %v281 = vunpack.c.l.bf16 %v217
      %v282 = vunpack.c.l.bf16 %v218
      %v283 = vunpack.c.l.bf16 %v219
      %v284 = vunpack.c.l.bf16 %v220
      %v285 = vunpack.c.l.bf16 %v221
      %v286 = vunpack.c.l.bf16 %v222
      %v287 = vunpack.c.l.bf16 %v223
      %v288 = vunpack.c.l.bf16 %v224
      %v289 = vunpack.c.l.bf16 %v225
      %v290 = vunpack.c.l.bf16 %v226
      %v291 = vunpack.c.l.bf16 %v227
      %v292 = vunpack.c.l.bf16 %v228
      %v293 = vunpack.c.l.bf16 %v229
      %v294 = vunpack.c.l.bf16 %v230
      %v295 = vunpack.c.l.bf16 %v231
      %v296 = vunpack.c.l.bf16 %v232
      %v297 = vunpack.c.l.bf16 %v233
      %v298 = vunpack.c.l.bf16 %v234
      %v299 = vunpack.c.l.bf16 %v235
      %v300 = vunpack.c.l.bf16 %v236
      %v301 = vunpack.c.l.bf16 %v237
      %v302 = vunpack.c.l.bf16 %v238
      %v303 = vunpack.c.l.bf16 %v239
      %v304 = vunpack.c.l.bf16 %v240
      %v305 = vunpack.c.l.bf16 %v241
      %v306 = vunpack.c.l.bf16 %v242
      %v307 = vunpack.c.l.bf16 %v243
      %v308 = vunpack.c.l.bf16 %v244
      %v309 = vunpack.c.l.bf16 %v245
      %v310 = vunpack.c.l.bf16 %v246
      %v311 = vunpack.c.l.bf16 %v247
      %v312 = vunpack.c.l.bf16 %v248
      %v313 = vunpack.c.l.bf16 %v249
      %v314 = vunpack.c.l.bf16 %v250
      %v315 = vunpack.c.l.bf16 %v251
      %v316 = vunpack.c.l.bf16 %v252
      %v317 = vunpack.c.l.bf16 %v253
      %v318 = vunpack.c.l.bf16 %v254
      %v319 = vunpack.c.l.bf16 %v255
      %v320 = vunpack.c.l.bf16 %v256
      %v321 = vunpack.c.l.bf16 %v257
      %v322 = vunpack.c.l.bf16 %v258
      %v323 = vunpack.c.l.bf16 %v259
      %v324 = vunpack.c.l.bf16 %v260
      %v325 = vunpack.c.l.bf16 %v261
      %v326 = vunpack.c.l.bf16 %v262
      %v327 = vunpack.c.l.bf16 %v263
      %v328 = vunpack.c.l.bf16 %v264
      %v329 = vunpack.c.l.bf16 %v265
      %v330 = vunpack.c.l.bf16 %v266
      %v331 = vunpack.c.l.bf16 %v267
      %v332 = vunpack.c.l.bf16 %v268
      %v333 = vunpack.c.l.bf16 %v269
      %v334 = vunpack.c.l.bf16 %v270
      %v335 = vunpack.c.l.bf16 %v271
      %v336 = vunpack.c.l.bf16 %v272
      %v337 = vunpack.c.l.bf16 %v273
      %v338 = vunpack.c.l.bf16 %v274
      %v339 = vunpack.c.l.bf16 %v275
      %v340 = vunpack.c.l.bf16 %v276
      %v341 = vunpack.c.l.bf16 %v277
      %v342 = vunpack.c.l.bf16 %v278
      %v343 = vld [vmem:[%s1] sm:$0x1]
      %v344 = vld [vmem:[%s2] sm:$0x1]
      %v346 = vlaneseq
      %v347 = vshrl.u32 %v346, 7
      %v348 = vsub.s32 0, %v347
      %v349 = vrot.slane %v343, %v348
      %v351 = vmul.f32 %v279, %v349
      %v352 = vmul.f32 %v280, %v349
      %v353 = vmul.f32 %v281, %v349
      %v354 = vmul.f32 %v282, %v349
      %v355 = vmul.f32 %v283, %v349
      %v356 = vmul.f32 %v284, %v349
      %v357 = vmul.f32 %v285, %v349
      %v358 = vmul.f32 %v286, %v349
      %v359 = vmul.f32 %v287, %v349
      %v360 = vmul.f32 %v288, %v349
      %v361 = vmul.f32 %v289, %v349
      %v362 = vmul.f32 %v290, %v349
      %v363 = vmul.f32 %v291, %v349
      %v364 = vmul.f32 %v292, %v349
      %v365 = vmul.f32 %v293, %v349
      %v366 = vmul.f32 %v294, %v349
      %v367 = vmul.f32 %v295, %v349
      %v368 = vmul.f32 %v296, %v349
      %v369 = vmul.f32 %v297, %v349
      %v370 = vmul.f32 %v298, %v349
      %v371 = vmul.f32 %v299, %v349
      %v372 = vmul.f32 %v300, %v349
      %v373 = vmul.f32 %v301, %v349
      %v374 = vmul.f32 %v302, %v349
      %v375 = vmul.f32 %v303, %v349
      %v376 = vmul.f32 %v304, %v349
      %v377 = vmul.f32 %v305, %v349
      %v378 = vmul.f32 %v306, %v349
      %v379 = vmul.f32 %v307, %v349
      %v380 = vmul.f32 %v308, %v349
      %v381 = vmul.f32 %v309, %v349
      %v382 = vmul.f32 %v310, %v349
      %v383 = vmul.f32 %v311, %v349
      %v384 = vmul.f32 %v312, %v349
      %v385 = vmul.f32 %v313, %v349
      %v386 = vmul.f32 %v314, %v349
      %v387 = vmul.f32 %v315, %v349
      %v388 = vmul.f32 %v316, %v349
      %v389 = vmul.f32 %v317, %v349
      %v390 = vmul.f32 %v318, %v349
      %v391 = vmul.f32 %v319, %v349
      %v392 = vmul.f32 %v320, %v349
      %v393 = vmul.f32 %v321, %v349
      %v394 = vmul.f32 %v322, %v349
      %v395 = vmul.f32 %v323, %v349
      %v396 = vmul.f32 %v324, %v349
      %v397 = vmul.f32 %v325, %v349
      %v398 = vmul.f32 %v326, %v349
      %v399 = vmul.f32 %v327, %v349
      %v400 = vmul.f32 %v328, %v349
      %v401 = vmul.f32 %v329, %v349
      %v402 = vmul.f32 %v330, %v349
      %v403 = vmul.f32 %v331, %v349
      %v404 = vmul.f32 %v332, %v349
      %v405 = vmul.f32 %v333, %v349
      %v406 = vmul.f32 %v334, %v349
      %v407 = vmul.f32 %v335, %v349
      %v408 = vmul.f32 %v336, %v349
      %v409 = vmul.f32 %v337, %v349
      %v410 = vmul.f32 %v338, %v349
      %v411 = vmul.f32 %v339, %v349
      %v412 = vmul.f32 %v340, %v349
      %v413 = vmul.f32 %v341, %v349
      %v414 = vmul.f32 %v342, %v349
      %v416 = vlaneseq
      %v417 = vshrl.u32 %v416, 7
      %v418 = vsub.s32 0, %v417
      %v419 = vrot.slane %v344, %v418
      %v421 = vadd.f32 %v351, %v419
      %v422 = vadd.f32 %v352, %v419
      %v423 = vadd.f32 %v353, %v419
      %v424 = vadd.f32 %v354, %v419
      %v425 = vadd.f32 %v355, %v419
      %v426 = vadd.f32 %v356, %v419
      %v427 = vadd.f32 %v357, %v419
      %v428 = vadd.f32 %v358, %v419
      %v429 = vadd.f32 %v359, %v419
      %v430 = vadd.f32 %v360, %v419
      %v431 = vadd.f32 %v361, %v419
      %v432 = vadd.f32 %v362, %v419
      %v433 = vadd.f32 %v363, %v419
      %v434 = vadd.f32 %v364, %v419
      %v435 = vadd.f32 %v365, %v419
      %v436 = vadd.f32 %v366, %v419
      %v437 = vadd.f32 %v367, %v419
      %v438 = vadd.f32 %v368, %v419
      %v439 = vadd.f32 %v369, %v419
      %v440 = vadd.f32 %v370, %v419
      %v441 = vadd.f32 %v371, %v419
      %v442 = vadd.f32 %v372, %v419
      %v443 = vadd.f32 %v373, %v419
      %v444 = vadd.f32 %v374, %v419
      %v445 = vadd.f32 %v375, %v419
      %v446 = vadd.f32 %v376, %v419
      %v447 = vadd.f32 %v377, %v419
      %v448 = vadd.f32 %v378, %v419
      %v449 = vadd.f32 %v379, %v419
      %v450 = vadd.f32 %v380, %v419
      %v451 = vadd.f32 %v381, %v419
      %v452 = vadd.f32 %v382, %v419
      %v453 = vadd.f32 %v383, %v419
      %v454 = vadd.f32 %v384, %v419
      %v455 = vadd.f32 %v385, %v419
      %v456 = vadd.f32 %v386, %v419
      %v457 = vadd.f32 %v387, %v419
      %v458 = vadd.f32 %v388, %v419
      %v459 = vadd.f32 %v389, %v419
      %v460 = vadd.f32 %v390, %v419
      %v461 = vadd.f32 %v391, %v419
      %v462 = vadd.f32 %v392, %v419
      %v463 = vadd.f32 %v393, %v419
      %v464 = vadd.f32 %v394, %v419
      %v465 = vadd.f32 %v395, %v419
      %v466 = vadd.f32 %v396, %v419
      %v467 = vadd.f32 %v397, %v419
      %v468 = vadd.f32 %v398, %v419
      %v469 = vadd.f32 %v399, %v419
      %v470 = vadd.f32 %v400, %v419
      %v471 = vadd.f32 %v401, %v419
      %v472 = vadd.f32 %v402, %v419
      %v473 = vadd.f32 %v403, %v419
      %v474 = vadd.f32 %v404, %v419
      %v475 = vadd.f32 %v405, %v419
      %v476 = vadd.f32 %v406, %v419
      %v477 = vadd.f32 %v407, %v419
      %v478 = vadd.f32 %v408, %v419
      %v479 = vadd.f32 %v409, %v419
      %v480 = vadd.f32 %v410, %v419
      %v481 = vadd.f32 %v411, %v419
      %v482 = vadd.f32 %v412, %v419
      %v483 = vadd.f32 %v413, %v419
      %v484 = vadd.f32 %v414, %v419
      %v485 = vmax.f32 %v421, 0.0
      %v486 = vmax.f32 %v422, 0.0
      %v487 = vmax.f32 %v423, 0.0
      %v488 = vmax.f32 %v424, 0.0
      %v489 = vmax.f32 %v425, 0.0
      %v490 = vmax.f32 %v426, 0.0
      %v491 = vmax.f32 %v427, 0.0
      %v492 = vmax.f32 %v428, 0.0
      %v493 = vmax.f32 %v429, 0.0
      %v494 = vmax.f32 %v430, 0.0
      %v495 = vmax.f32 %v431, 0.0
      %v496 = vmax.f32 %v432, 0.0
      %v497 = vmax.f32 %v433, 0.0
      %v498 = vmax.f32 %v434, 0.0
      %v499 = vmax.f32 %v435, 0.0
      %v500 = vmax.f32 %v436, 0.0
      %v501 = vmax.f32 %v437, 0.0
      %v502 = vmax.f32 %v438, 0.0
      %v503 = vmax.f32 %v439, 0.0
      %v504 = vmax.f32 %v440, 0.0
      %v505 = vmax.f32 %v441, 0.0
      %v506 = vmax.f32 %v442, 0.0
      %v507 = vmax.f32 %v443, 0.0
      %v508 = vmax.f32 %v444, 0.0
      %v509 = vmax.f32 %v445, 0.0
      %v510 = vmax.f32 %v446, 0.0
      %v511 = vmax.f32 %v447, 0.0
      %v512 = vmax.f32 %v448, 0.0
      %v513 = vmax.f32 %v449, 0.0
      %v514 = vmax.f32 %v450, 0.0
      %v515 = vmax.f32 %v451, 0.0
      %v516 = vmax.f32 %v452, 0.0
      %v517 = vmax.f32 %v453, 0.0
      %v518 = vmax.f32 %v454, 0.0
      %v519 = vmax.f32 %v455, 0.0
      %v520 = vmax.f32 %v456, 0.0
      %v521 = vmax.f32 %v457, 0.0
      %v522 = vmax.f32 %v458, 0.0
      %v523 = vmax.f32 %v459, 0.0
      %v524 = vmax.f32 %v460, 0.0
      %v525 = vmax.f32 %v461, 0.0
      %v526 = vmax.f32 %v462, 0.0
      %v527 = vmax.f32 %v463, 0.0
      %v528 = vmax.f32 %v464, 0.0
      %v529 = vmax.f32 %v465, 0.0
      %v530 = vmax.f32 %v466, 0.0
      %v531 = vmax.f32 %v467, 0.0
      %v532 = vmax.f32 %v468, 0.0
      %v533 = vmax.f32 %v469, 0.0
      %v534 = vmax.f32 %v470, 0.0
      %v535 = vmax.f32 %v471, 0.0
      %v536 = vmax.f32 %v472, 0.0
      %v537 = vmax.f32 %v473, 0.0
      %v538 = vmax.f32 %v474, 0.0
      %v539 = vmax.f32 %v475, 0.0
      %v540 = vmax.f32 %v476, 0.0
      %v541 = vmax.f32 %v477, 0.0
      %v542 = vmax.f32 %v478, 0.0
      %v543 = vmax.f32 %v479, 0.0
      %v544 = vmax.f32 %v480, 0.0
      %v545 = vmax.f32 %v481, 0.0
      %v546 = vmax.f32 %v482, 0.0
      %v547 = vmax.f32 %v483, 0.0
      %v548 = vmax.f32 %v484, 0.0
      %vm549 = vcmask 130048
      %550 = vst.msk [vmem:[%s213] sm:$0xff] %vm549, %v485
      %551 = vst.msk [vmem:[%s213 + $0x8] sm:$0xff] %vm549, %v486
      %552 = vst.msk [vmem:[%s213 + $0x10] sm:$0xff] %vm549, %v487
      %553 = vst.msk [vmem:[%s213 + $0x18] sm:$0xff] %vm549, %v488
      %554 = vst.msk [vmem:[%s213 + $0x20] sm:$0xff] %vm549, %v489
      %555 = vst.msk [vmem:[%s213 + $0x28] sm:$0xff] %vm549, %v490
      %556 = vst.msk [vmem:[%s213 + $0x30] sm:$0xff] %vm549, %v491
      %557 = vst.msk [vmem:[%s213 + $0x38] sm:$0xff] %vm549, %v492
      %558 = vst.msk [vmem:[%s213 + $0x40] sm:$0xff] %vm549, %v493
      %559 = vst.msk [vmem:[%s213 + $0x48] sm:$0xff] %vm549, %v494
      %560 = vst.msk [vmem:[%s213 + $0x50] sm:$0xff] %vm549, %v495
      %561 = vst.msk [vmem:[%s213 + $0x58] sm:$0xff] %vm549, %v496
      %562 = vst.msk [vmem:[%s213 + $0x60] sm:$0xff] %vm549, %v497
      %563 = vst.msk [vmem:[%s213 + $0x68] sm:$0xff] %vm549, %v498
      %564 = vst.msk [vmem:[%s213 + $0x70] sm:$0xff] %vm549, %v499
      %565 = vst.msk [vmem:[%s213 + $0x78] sm:$0xff] %vm549, %v500
      %566 = vst.msk [vmem:[%s213 + $0x80] sm:$0xff] %vm549, %v501
      %567 = vst.msk [vmem:[%s213 + $0x88] sm:$0xff] %vm549, %v502
      %568 = vst.msk [vmem:[%s213 + $0x90] sm:$0xff] %vm549, %v503
      %569 = vst.msk [vmem:[%s213 + $0x98] sm:$0xff] %vm549, %v504
      %570 = vst.msk [vmem:[%s213 + $0xa0] sm:$0xff] %vm549, %v505
      %571 = vst.msk [vmem:[%s213 + $0xa8] sm:$0xff] %vm549, %v506
      %572 = vst.msk [vmem:[%s213 + $0xb0] sm:$0xff] %vm549, %v507
      %573 = vst.msk [vmem:[%s213 + $0xb8] sm:$0xff] %vm549, %v508
      %574 = vst.msk [vmem:[%s213 + $0xc0] sm:$0xff] %vm549, %v509
      %575 = vst.msk [vmem:[%s213 + $0xc8] sm:$0xff] %vm549, %v510
      %576 = vst.msk [vmem:[%s213 + $0xd0] sm:$0xff] %vm549, %v511
      %577 = vst.msk [vmem:[%s213 + $0xd8] sm:$0xff] %vm549, %v512
      %578 = vst.msk [vmem:[%s213 + $0xe0] sm:$0xff] %vm549, %v513
      %579 = vst.msk [vmem:[%s213 + $0xe8] sm:$0xff] %vm549, %v514
      %580 = vst.msk [vmem:[%s213 + $0xf0] sm:$0xff] %vm549, %v515
      %581 = vst.msk [vmem:[%s213 + $0xf8] sm:$0xff] %vm549, %v516
      %582 = vst.msk [vmem:[%s213 + $0x100] sm:$0xff] %vm549, %v517
      %583 = vst.msk [vmem:[%s213 + $0x108] sm:$0xff] %vm549, %v518
      %584 = vst.msk [vmem:[%s213 + $0x110] sm:$0xff] %vm549, %v519
      %585 = vst.msk [vmem:[%s213 + $0x118] sm:$0xff] %vm549, %v520
      %586 = vst.msk [vmem:[%s213 + $0x120] sm:$0xff] %vm549, %v521
      %587 = vst.msk [vmem:[%s213 + $0x128] sm:$0xff] %vm549, %v522
      %588 = vst.msk [vmem:[%s213 + $0x130] sm:$0xff] %vm549, %v523
      %589 = vst.msk [vmem:[%s213 + $0x138] sm:$0xff] %vm549, %v524
      %590 = vst.msk [vmem:[%s213 + $0x140] sm:$0xff] %vm549, %v525
      %591 = vst.msk [vmem:[%s213 + $0x148] sm:$0xff] %vm549, %v526
      %592 = vst.msk [vmem:[%s213 + $0x150] sm:$0xff] %vm549, %v527
      %593 = vst.msk [vmem:[%s213 + $0x158] sm:$0xff] %vm549, %v528
      %594 = vst.msk [vmem:[%s213 + $0x160] sm:$0xff] %vm549, %v529
      %595 = vst.msk [vmem:[%s213 + $0x168] sm:$0xff] %vm549, %v530
      %596 = vst.msk [vmem:[%s213 + $0x170] sm:$0xff] %vm549, %v531
      %597 = vst.msk [vmem:[%s213 + $0x178] sm:$0xff] %vm549, %v532
      %598 = vst.msk [vmem:[%s213 + $0x180] sm:$0xff] %vm549, %v533
      %599 = vst.msk [vmem:[%s213 + $0x188] sm:$0xff] %vm549, %v534
      %600 = vst.msk [vmem:[%s213 + $0x190] sm:$0xff] %vm549, %v535
      %601 = vst.msk [vmem:[%s213 + $0x198] sm:$0xff] %vm549, %v536
      %602 = vst.msk [vmem:[%s213 + $0x1a0] sm:$0xff] %vm549, %v537
      %603 = vst.msk [vmem:[%s213 + $0x1a8] sm:$0xff] %vm549, %v538
      %604 = vst.msk [vmem:[%s213 + $0x1b0] sm:$0xff] %vm549, %v539
      %605 = vst.msk [vmem:[%s213 + $0x1b8] sm:$0xff] %vm549, %v540
      %606 = vst.msk [vmem:[%s213 + $0x1c0] sm:$0xff] %vm549, %v541
      %607 = vst.msk [vmem:[%s213 + $0x1c8] sm:$0xff] %vm549, %v542
      %608 = vst.msk [vmem:[%s213 + $0x1d0] sm:$0xff] %vm549, %v543
      %609 = vst.msk [vmem:[%s213 + $0x1d8] sm:$0xff] %vm549, %v544
      %610 = vst.msk [vmem:[%s213 + $0x1e0] sm:$0xff] %vm549, %v545
      %611 = vst.msk [vmem:[%s213 + $0x1e8] sm:$0xff] %vm549, %v546
      %612 = vst.msk [vmem:[%s213 + $0x1f0] sm:$0xff] %vm549, %v547
      %613 = vst.msk [vmem:[%s213 + $0x1f8] sm:$0xff] %vm549, %v548
      %s614 = smul.u32 32, %s19
      %p615 = scmp.lt.s32.totalorder %s18, 1
      %s616 = scalar_select %p615, %s18, 1
      %p617 = scmp.lt.s32.totalorder %s614, 31
      %s618 = scalar_select %p617, %s614, 31
      %s619 = smul.addr %s618, 2
      %s620 = smul.addr %s616, 64
      %s621 = sadd.s32 %s619, %s620
      %s622 = smul.addr %s621, 8
      %s623 = scalar_lea.vmem %s3, %s622
      // Predicated region
      $region33: #{up_conv_forward.3} parent=31 // pred_check
        %p624 = pneg %p116
      $region34: #{up_conv_forward.3} parent=31 // pred_check_branch
        %626 = sbr.rel (%p624) target = $region36
      $region35: #{up_conv_forward.3} parent=31 // pred_region
        %s627 = smul.u32 32, %s19
      $region36: #{up_conv_forward.3} parent=31 // pred_fallthru
        _
    $region32: #{up_conv_forward.3} parent=5 // pred_fallthru
      _
    %p628 = scmp.le.s32.totalorder 2, %s9
    // Predicated region
    $region37: #{up_conv_forward.3} parent=5 // pred_check
      %p629 = pneg %p628
    $region38: #{up_conv_forward.3} parent=5 // pred_check_branch
      %631 = sbr.rel (%p629) target = $region40
    $region39: #{up_conv_forward.3} parent=5 // pred_region
      %s632 = ssub.s32 %s9, 2
      // Predicated region
      $region41: #{up_conv_forward.3} parent=39 // pred_check
        %p633 = pneg %p122
      $region42: #{up_conv_forward.3} parent=39 // pred_check_branch
        %635 = sbr.rel (%p633) target = $region44
      $region43: #{up_conv_forward.3} parent=39 // pred_region
        %s636 = smul.u32 32, %s21
        %p637 = scmp.lt.s32.totalorder %s20, 1
        %s638 = scalar_select %p637, %s20, 1
        %p639 = scmp.lt.s32.totalorder %s636, 31
        %s640 = scalar_select %p639, %s636, 31
        %s641 = smul.addr %s640, 2
        %s642 = smul.addr %s638, 64
        %s643 = sadd.s32 %s641, %s642
        %s644 = smul.addr %s643, 8
        %s645 = scalar_lea.vmem %s3, %s644
      $region44: #{up_conv_forward.3} parent=39 // pred_fallthru
        _
    $region40: #{up_conv_forward.3} parent=5 // pred_fallthru
      _
  $region6: #{up_conv_forward.3} parent=0 // loop_footer
    %s13 = sadd.s32 1, %s9
  $region7: #{up_conv_forward.3} parent=0 // loop_footer_branch
    %8 = sbr.rel target = $region3
  $region8: #{up_conv_forward.3} parent=0 // loop_exit
    _

// kernel: up_conv_forward.2
$region0: #{up_conv_forward.2}
  #allocation0 [shape = 'u32[]', space=smem, size = 0x4, offset = 0x4, fixed_abs, tag = 'smem constant byte address 0x4 - core index']
  #allocation1 [shape = 'u32[144,128]{1,0:T(1,128)}', space=vmem, size = 0x12000, scoped, tag = 'internal scratch']
  %s0 = inlined_call_operand.vmem [shape: bf16[2,18,16,12], index: 0, kind: input, shape index: {}]
  %s1 = inlined_call_operand.vmem [shape: bf16[3,12,16], index: 1, kind: input, shape index: {}]
  %s2 = inlined_call_operand.vmem [shape: bf16[2,32,16,16], index: 2, kind: output, shape index: {0}]
  %s3 = inlined_call_operand.vmem [shape: f32[2,2,2,16], index: 3, kind: output, shape index: {1}]
  %4 = xla_tuple %s2, %s3
  %s5 = sld [smem:[#allocation0]]
  $region49: #{up_conv_forward.2} parent=0
    _
  %s7 = ssub.s32 1, %s5
  %s8 = scalar_select 0, %s7, %s5
  loop: start=0, step=1, limit=6
  $region2: #{up_conv_forward.2} parent=0 // loop_pre_header
    _
  $region3: #{up_conv_forward.2} parent=0 // loop_header
    %s10 = sphi 0, %s14
    %p11 = scmp.ge.s32.totalorder %s10, 6
    %s17 = sphi 0, %s29
    %s18 = sphi 0, %s25
    %s19 = sphi 0, %s17
    %s20 = sphi 0, %s18
    %s21 = sphi 0, %s19
    %s22 = sphi 0, %s20
    %s32 = sphi 0, %s34
    %s35 = sphi 0, %s32
    %s36 = sphi 0, %s35
    %s52 = sphi 0, %s36
    %s56 = sphi 0, %s56
    %s58 = sphi 0, %s56
    %s59 = sphi 0, %s58
    %s73 = sphi 0, %s59
    %s81 = sphi 0, %s83
    %s84 = sphi 0, %s81
    %s85 = sphi 0, %s84
    %s101 = sphi 0, %s85
    %s109 = sphi 0, %s111
    %s112 = sphi 0, %s109
    %s113 = sphi 0, %s112
    %s129 = sphi 0, %s113
  $region4: #{up_conv_forward.2} parent=0 // loop_header_branch
    %13 = sbr.rel (%p11) target = $region8
  $region5: #{up_conv_forward.2} parent=0 // loop_body
    %s15 = ssub.s32 %s10, 1
    %s16 = ssub.s32 %s10, 2
    %s23 = sadd.s32 1, %s18
    %p24 = scmp.ge.s32.totalorder %s23, 2
    %s25 = scalar_select %p24, 0, %s23
    %s26 = sadd.s32 1, %s17
    %s27 = scalar_select %p24, %s26, %s17
    %p28 = scmp.ge.s32.totalorder %s27, 2
    %s29 = scalar_select %p28, 0, %s27
    %s30 = ssub.s32 %s17, %s29
    %p31 = scmp.eq.s32.totalorder %s30, 0
    %s33 = sadd.s32 %s32, 1
    %s34 = scalar_select %p31, %s32, %s33
    %p37 = pneg %p31
    %p38 = scmp.eq.s32.totalorder %s10, 3
    %p39 = por %p37, %p38
    %p40 = scmp.ne.s32.totalorder %s32, %s35
    %p41 = scmp.eq.s32.totalorder %s10, 0
    %p42 = por %p40, %p41
    %p43 = scmp.ne.s32.totalorder %s32, %s35
    %p44 = scmp.eq.s32.totalorder %s15, 3
    %p45 = por %p43, %p44
    %p46 = scmp.ne.s32.totalorder %s35, %s36
    %p47 = scmp.eq.s32.totalorder %s15, 0
    %p48 = por %p46, %p47
    %p49 = scmp.ne.s32.totalorder %s35, %s36
    %p50 = scmp.eq.s32.totalorder %s16, 3
    %p51 = por %p49, %p50
    %p53 = scmp.ne.s32.totalorder %s36, %s52
    %p54 = scmp.eq.s32.totalorder %s16, 0
    %p55 = por %p53, %p54
    %s57 = sadd.s32 %s56, 1
    %p60 = scmp.eq.s32.totalorder %s10, 3
    %p61 = scmp.ne.s32.totalorder %s56, %s58
    %p62 = scmp.eq.s32.totalorder %s10, 0
    %p63 = por %p61, %p62
    %p64 = scmp.ne.s32.totalorder %s56, %s58
    %p65 = scmp.eq.s32.totalorder %s15, 3
    %p66 = por %p64, %p65
    %p67 = scmp.ne.s32.totalorder %s58, %s59
    %p68 = scmp.eq.s32.totalorder %s15, 0
    %p69 = por %p67, %p68
    %p70 = scmp.ne.s32.totalorder %s58, %s59
    %p71 = scmp.eq.s32.totalorder %s16, 3
    %p72 = por %p70, %p71
    %p74 = scmp.ne.s32.totalorder %s59, %s73
    %p75 = scmp.eq.s32.totalorder %s16, 0
    %p76 = por %p74, %p75
    %s77 = ssub.s32 %s17, %s29
    %s78 = ssub.s32 %s18, %s25
    %s79 = sor.u32 %s77, %s78
    %p80 = scmp.eq.s32.totalorder %s79, 0
    %s82 = sadd.s32 %s81, 1
    %s83 = scalar_select %p80, %s81, %s82
    %p86 = pneg %p80
    %p87 = scmp.eq.s32.totalorder %s10, 3
    %p88 = por %p86, %p87
    %p89 = scmp.ne.s32.totalorder %s81, %s84
    %p90 = scmp.eq.s32.totalorder %s10, 0
    %p91 = por %p89, %p90
    %p92 = scmp.ne.s32.totalorder %s81, %s84
    %p93 = scmp.eq.s32.totalorder %s15, 3
    %p94 = por %p92, %p93
    %p95 = scmp.ne.s32.totalorder %s84, %s85
    %p96 = scmp.eq.s32.totalorder %s15, 0
    %p97 = por %p95, %p96
    %p98 = scmp.ne.s32.totalorder %s84, %s85
    %p99 = scmp.eq.s32.totalorder %s16, 3
    %p100 = por %p98, %p99
    %p102 = scmp.ne.s32.totalorder %s85, %s101
    %p103 = scmp.eq.s32.totalorder %s16, 0
    %p104 = por %p102, %p103
    %s105 = ssub.s32 %s17, %s29
    %s106 = ssub.s32 %s18, %s25
    %s107 = sor.u32 %s105, %s106
    %p108 = scmp.eq.s32.totalorder %s107, 0
    %s110 = sadd.s32 %s109, 1
    %s111 = scalar_select %p108, %s109, %s110
    %p114 = pneg %p108
    %p115 = scmp.eq.s32.totalorder %s10, 3
    %p116 = por %p114, %p115
    %p117 = scmp.ne.s32.totalorder %s109, %s112
    %p118 = scmp.eq.s32.totalorder %s10, 0
    %p119 = por %p117, %p118
    %p120 = scmp.ne.s32.totalorder %s109, %s112
    %p121 = scmp.eq.s32.totalorder %s15, 3
    %p122 = por %p120, %p121
    %p123 = scmp.ne.s32.totalorder %s112, %s113
    %p124 = scmp.eq.s32.totalorder %s15, 0
    %p125 = por %p123, %p124
    %p126 = scmp.ne.s32.totalorder %s112, %s113
    %p127 = scmp.eq.s32.totalorder %s16, 3
    %p128 = por %p126, %p127
    %p130 = scmp.ne.s32.totalorder %s113, %s129
    %p131 = scmp.eq.s32.totalorder %s16, 0
    %p132 = por %p130, %p131
    %p133 = scmp.le.s32.totalorder 1, %s10
    %p134 = scmp.lt.s32.totalorder %s10, 5
    %p135 = pnand %p133, %p134
    %p136 = pneg %p135
    // Predicated region
    $region9: #{up_conv_forward.2} parent=5 // pred_check
      _
    $region10: #{up_conv_forward.2} parent=5 // pred_check_branch
      %138 = sbr.rel (%p135) target = $region12
    $region11: #{up_conv_forward.2} parent=5 // pred_region
      %s139 = ssub.s32 %s10, 1
      // Predicated region
      $region13: #{up_conv_forward.2} parent=11 // pred_check
        %p140 = pneg %p69
      $region14: #{up_conv_forward.2} parent=11 // pred_check_branch
        %142 = sbr.rel (%p140) target = $region16
      $region15: #{up_conv_forward.2} parent=11 // pred_region
        _
      $region16: #{up_conv_forward.2} parent=11 // pred_fallthru
        _
    $region12: #{up_conv_forward.2} parent=5 // pred_fallthru
      _
    %p143 = scmp.lt.s32.totalorder %s10, 4
    // Predicated region
    $region17: #{up_conv_forward.2} parent=5 // pred_check
      %p144 = pneg %p143
    $region18: #{up_conv_forward.2} parent=5 // pred_check_branch
      %146 = sbr.rel (%p144) target = $region20
    $region19: #{up_conv_forward.2} parent=5 // pred_region
      // Predicated region
      $region21: #{up_conv_forward.2} parent=19 // pred_check
        %p147 = pneg %p42
      $region22: #{up_conv_forward.2} parent=19 // pred_check_branch
        %149 = sbr.rel (%p147) target = $region24
      $region23: #{up_conv_forward.2} parent=19 // pred_region
        %p150 = scmp.lt.s32.totalorder %s17, 1
        %s151 = scalar_select %p150, %s17, 1
        %s152 = smul.addr %s151, 36
        %s153 = smul.addr %s152, 4
        %s154 = scalar_lea.vmem %s0, %s153
      $region24: #{up_conv_forward.2} parent=19 // pred_fallthru
        _
    $region20: #{up_conv_forward.2} parent=5 // pred_fallthru
      _
    %p155 = scmp.le.s32.totalorder 1, %s10
    %p156 = scmp.lt.s32.totalorder %s10, 5
    %p157 = pnand %p155, %p156
    %p158 = pneg %p157
    // Predicated region
    $region25: #{up_conv_forward.2} parent=5 // pred_check
      _
    $region26: #{up_conv_forward.2} parent=5 // pred_check_branch
      %160 = sbr.rel (%p157) target = $region28
    $region27: #{up_conv_forward.2} parent=5 // pred_region
      %s161 = ssub.s32 %s10, 1
      %p162 = scmp.lt.s32.totalorder %s19, 1
      %s163 = scalar_select %p162, %s19, 1
      %s164 = smul.addr %s163, 36
      %s165 = smul.addr %s164, 4
      %s166 = scalar_lea.vmem %s0, %s165
      %p167 = pneg %p48
      %p168 = pneg %p45
      %p169 = pneg %p69
      %p170 = pneg %p66
      %p171 = pneg %p97
      %p172 = pneg %p94
      %s173 = smul.u32 16, %s20
      %p174 = scmp.lt.s32.totalorder %s19, 1
      %s175 = scalar_select %p174, %s19, 1
      %p176 = scmp.lt.s32.totalorder %s173, 31
      %s177 = scalar_select %p176, %s173, 31
      %s178 = smul.addr %s177, 2
      %s179 = smul.addr %s175, 64
      %s180 = sadd.s32 %s178, %s179
      %s181 = smul.addr %s180, 4
      %s182 = scalar_lea.vmem %s2, %s181
      %p183 = pneg %p125
      %p184 = pneg %p122
      %p185 = scmp.lt.s32.totalorder %s19, 1
      %s186 = scalar_select %p185, %s19, 1
      %p187 = scmp.lt.s32.totalorder %s20, 1
      %s188 = scalar_select %p187, %s20, 1
      %s189 = smul.addr %s186, 2
      %s190 = sadd.s32 %s188, %s189
      %s191 = smul.addr %s190, 2
      %s192 = scalar_lea.vmem %s3, %s191
      %p193 = scmp.lt.s32.totalorder %s19, 1
      %s194 = scalar_select %p193, %s19, 1
      %s195 = smul.addr %s194, 36
      %s196 = smul.addr %s195, 4
      %s197 = scalar_lea.vmem %s0, %s196
      %s198 = smul.u32 16, %s20
      %p199 = scmp.lt.s32.totalorder %s19, 1
      %s200 = scalar_select %p199, %s19, 1
      %p201 = scmp.lt.s32.totalorder %s198, 31
      %s202 = scalar_select %p201, %s198, 31
      %s203 = smul.addr %s202, 2
      %s204 = smul.addr %s200, 64
      %s205 = sadd.s32 %s203, %s204
      %s206 = smul.addr %s205, 4
      %s207 = scalar_lea.vmem %s2, %s206
      %s208 = smul.u32 16, %s20
      %p209 = scmp.lt.s32.totalorder %s19, 1
      %s210 = scalar_select %p209, %s19, 1
      %p211 = scmp.lt.s32.totalorder %s20, 1
      %s212 = scalar_select %p211, %s20, 1
      %s213 = smul.addr %s210, 2
      %s214 = sadd.s32 %s212, %s213
      %s215 = smul.addr %s214, 2
      %s216 = scalar_lea.vmem %s3, %s215
      %s218 = smul.u32 %s20, 8
      %s219 = smul.u32 %s218, 2
      %s220 = smul.addr %s219, 4
      %s221 = scalar_lea.vmem %s197, %s220
      %v222 = vld [vmem:[%s221] sm:$0xf]
      %v223 = vld [vmem:[%s221 + $0x4] sm:$0xf]
      %v224 = vld [vmem:[%s221 + $0x8] sm:$0xf]
      %v225 = vld [vmem:[%s221 + $0xc] sm:$0xf]
      %v226 = vld [vmem:[%s221 + $0x10] sm:$0xf]
      %v227 = vld [vmem:[%s221 + $0x14] sm:$0xf]
      %v228 = vld [vmem:[%s221 + $0x18] sm:$0xf]
      %v229 = vld [vmem:[%s221 + $0x1c] sm:$0xf]
      %v230 = vld [vmem:[%s221 + $0x20] sm:$0xf]
      %v231 = vld [vmem:[%s221 + $0x24] sm:$0xf]
      %v232 = vld [vmem:[%s221 + $0x28] sm:$0xf]
      %v233 = vld [vmem:[%s221 + $0x2c] sm:$0xf]
      %v234 = vld [vmem:[%s221 + $0x30] sm:$0xf]
      %v235 = vld [vmem:[%s221 + $0x34] sm:$0xf]
      %v236 = vld [vmem:[%s221 + $0x38] sm:$0xf]
      %v237 = vld [vmem:[%s221 + $0x3c] sm:$0xf]
      %v238 = vld [vmem:[%s221 + $0x40] sm:$0xf]
      %v239 = vld [vmem:[%s221 + $0x44] sm:$0xf]
      %v240 = vld [vmem:[%s221 + $0x48] sm:$0xf]
      %v241 = vld [vmem:[%s221 + $0x4c] sm:$0xf]
      %v242 = vld [vmem:[%s1] sm:$0xf]
      %v243 = vld [vmem:[%s1 + $0x4] sm:$0x3]
      %s244 = scalar_lea.vmem %s1, 8
      %v245 = vld [vmem:[%s244] sm:$0xf]
      %v246 = vld [vmem:[%s244 + $0x4] sm:$0x3]
      %v263 = vunpack.c.l.b16 %v224
      %v264 = vunpack.c.l.b16 %v225
      %v265 = vunpack.c.l.b16 %v226
      %v266 = vunpack.c.l.b16 %v227
      %v267 = vunpack.c.l.b16 %v228
      %v268 = vunpack.c.l.b16 %v229
      %v269 = vunpack.c.l.b16 %v230
      %v270 = vunpack.c.l.b16 %v231
      %v271 = vunpack.c.l.b16 %v232
      %v272 = vunpack.c.l.b16 %v233
      %v273 = vunpack.c.l.b16 %v234
      %v274 = vunpack.c.l.b16 %v235
      %v275 = vunpack.c.l.b16 %v236
      %v276 = vunpack.c.l.b16 %v237
      %v277 = vunpack.c.l.b16 %v238
      %v278 = vunpack.c.l.b16 %v239
      %v279 = vpack.c.b16 %v264, %v263
      %v280 = vpack.c.b16 %v266, %v265
      %v281 = vpack.c.b16 %v268, %v267
      %v282 = vpack.c.b16 %v270, %v269
      %v283 = vpack.c.b16 %v272, %v271
      %v284 = vpack.c.b16 %v274, %v273
      %v285 = vpack.c.b16 %v276, %v275
      %v286 = vpack.c.b16 %v278, %v277
      %v289 = vunpack.c.l.b16 %v245
      %v290 = vunpack.c.l.b16 %v246
      %v291 = vpack.c.b16 %v290, %v289
      %vm292 = vcmask 97280
      %v294 = vsel %vm292, %v279, 0
      %v297 = vsel %vm292, %v280, 0
      %v300 = vsel %vm292, %v281, 0
      %v303 = vsel %vm292, %v282, 0
      %v306 = vsel %vm292, %v283, 0
      %v309 = vsel %vm292, %v284, 0
      %v312 = vsel %vm292, %v285, 0
      %v315 = vsel %vm292, %v286, 0
      %vm317 = vcmask 1045504
      %v319 = vsel %vm317, %v291, 0
      %321 = vmatprep.subr.bf16.mxu0 0
      %322 = vmatpush1.bf16.msra.mxu0 %v319
      %323 = vmatprep.subr.bf16.mxu0 0
      %324 = vmatpush1.bf16.msra.mxu0 0
      %325 = vmatprep.subr.bf16.mxu0 0
      %326 = vmatpush1.bf16.msra.mxu0 0
      %327 = vmatprep.subr.bf16.mxu0 0
      %328 = vmatpush1.bf16.msra.mxu0 0
      %329 = vmatprep.subr.bf16.mxu0 0
      %330 = vmatpush1.bf16.msra.mxu0 0
      %331 = vmatprep.subr.bf16.mxu0 0
      %332 = vmatpush1.bf16.msra.mxu0 0
      %333 = vmatprep.subr.bf16.mxu0 0
      %334 = vmatpush1.bf16.msra.mxu0 0
      %335 = vmatprep.subr.bf16.mxu0 0
      %336 = vmatpush1.bf16.msra.mxu0 0
      %337 = vmatprep.subr.bf16.mxu0 0
      %338 = vmatpush1.bf16.msra.mxu0 0
      %339 = vmatprep.subr.bf16.mxu0 0
      %340 = vmatpush1.bf16.msra.mxu0 0
      %341 = vmatprep.subr.bf16.mxu0 0
      %342 = vmatpush1.bf16.msra.mxu0 0
      %343 = vmatprep.subr.bf16.mxu0 0
      %344 = vmatpush1.bf16.msra.mxu0 0
      %345 = vmatprep.subr.bf16.mxu0 0
      %346 = vmatpush1.bf16.msra.mxu0 0
      %347 = vmatprep.subr.bf16.mxu0 0
      %348 = vmatpush1.bf16.msra.mxu0 0
      %349 = vmatprep.subr.bf16.mxu0 0
      %350 = vmatpush1.bf16.msra.mxu0 0
      %351 = vmatprep.subr.bf16.mxu0 0
      %352 = vmatpush1.bf16.msra.mxu0 0
      %353 = vmatprep.mubr.bf16.mxu0 0
      %354 = vmatmul.mubr.bf16.gmra.mrb[0].mxu0 %v294
      %v355 = vpop.f32.mrb[0].mxu0
      %v356 = vadd.f32 0.0, %v355
      %v357 = vpop.f32.mrb[0].mxu0
      %v358 = vpop.f32.mrb[0].mxu0
      %v359 = vadd.f32 0.0, %v358
      %v360 = vpop.f32.mrb[0].mxu0
      %361 = vmatprep.mubr.bf16.mxu0 0
      %362 = vmatmul.mubr.bf16.gmra.mrb[0].mxu0 %v294
      %v363 = vpop.f32.mrb[0].mxu0
      %v364 = vadd.f32 0.0, %v363
      %v365 = vpop.f32.mrb[0].mxu0
      %v366 = vpop.f32.mrb[0].mxu0
      %v367 = vadd.f32 0.0, %v366
      %v368 = vpop.f32.mrb[0].mxu0
      %369 = vmatprep.mubr.bf16.mxu0 0
      %370 = vmatmul.mubr.bf16.gmra.mrb[0].mxu0 %v297
      %v371 = vpop.f32.mrb[0].mxu0
      %v372 = vadd.f32 0.0, %v371
      %v373 = vpop.f32.mrb[0].mxu0
      %v374 = vpop.f32.mrb[0].mxu0
      %v375 = vadd.f32 0.0, %v374
      %v376 = vpop.f32.mrb[0].mxu0
      %377 = vmatprep.mubr.bf16.mxu0 0
      %378 = vmatmul.mubr.bf16.gmra.mrb[0].mxu0 %v297
      %v379 = vpop.f32.mrb[0].mxu0
      %v380 = vadd.f32 0.0, %v379
      %v381 = vpop.f32.mrb[0].mxu0
      %v382 = vpop.f32.mrb[0].mxu0
      %v383 = vadd.f32 0.0, %v382
      %v384 = vpop.f32.mrb[0].mxu0
      %385 = vmatprep.mubr.bf16.mxu0 0
      %386 = vmatmul.mubr.bf16.gmra.mrb[0].mxu0 %v300
      %v387 = vpop.f32.mrb[0].mxu0
      %v388 = vadd.f32 0.0, %v387
      %v389 = vpop.f32.mrb[0].mxu0
      %v390 = vpop.f32.mrb[0].mxu0
      %v391 = vadd.f32 0.0, %v390
      %v392 = vpop.f32.mrb[0].mxu0
      %393 = vmatprep.mubr.bf16.mxu0 0
      %394 = vmatmul.mubr.bf16.gmra.mrb[0].mxu0 %v300
      %v395 = vpop.f32.mrb[0].mxu0
      %v396 = vadd.f32 0.0, %v395
      %v397 = vpop.f32.mrb[0].mxu0
      %v398 = vpop.f32.mrb[0].mxu0
      %v399 = vadd.f32 0.0, %v398
      %v400 = vpop.f32.mrb[0].mxu0
      %401 = vmatprep.mubr.bf16.mxu0 0
      %402 = vmatmul.mubr.bf16.gmra.mrb[0].mxu0 %v303
      %v403 = vpop.f32.mrb[0].mxu0
      %v404 = vadd.f32 0.0, %v403
      %v405 = vpop.f32.mrb[0].mxu0
      %v406 = vpop.f32.mrb[0].mxu0
      %v407 = vadd.f32 0.0, %v406
      %v408 = vpop.f32.mrb[0].mxu0
      %409 = vmatprep.mubr.bf16.mxu0 0
      %410 = vmatmul.mubr.bf16.gmra.mrb[0].mxu0 %v303
      %v411 = vpop.f32.mrb[0].mxu0
      %v412 = vadd.f32 0.0, %v411
      %v413 = vpop.f32.mrb[0].mxu0
      %v414 = vpop.f32.mrb[0].mxu0
      %v415 = vadd.f32 0.0, %v414
      %v416 = vpop.f32.mrb[0].mxu0
      %417 = vmatprep.mubr.bf16.mxu0 0
      %418 = vmatmul.mubr.bf16.gmra.mrb[0].mxu0 %v306
      %v419 = vpop.f32.mrb[0].mxu0
      %v420 = vadd.f32 0.0, %v419
      %v421 = vpop.f32.mrb[0].mxu0
      %v422 = vpop.f32.mrb[0].mxu0
      %v423 = vadd.f32 0.0, %v422
      %v424 = vpop.f32.mrb[0].mxu0
      %425 = vmatprep.mubr.bf16.mxu0 0
      %426 = vmatmul.mubr.bf16.gmra.mrb[0].mxu0 %v306
      %v427 = vpop.f32.mrb[0].mxu0
      %v428 = vadd.f32 0.0, %v427
      %v429 = vpop.f32.mrb[0].mxu0
      %v430 = vpop.f32.mrb[0].mxu0
      %v431 = vadd.f32 0.0, %v430
      %v432 = vpop.f32.mrb[0].mxu0
      %433 = vmatprep.mubr.bf16.mxu0 0
      %434 = vmatmul.mubr.bf16.gmra.mrb[0].mxu0 %v309
      %v435 = vpop.f32.mrb[0].mxu0
      %v436 = vadd.f32 0.0, %v435
      %v437 = vpop.f32.mrb[0].mxu0
      %v438 = vpop.f32.mrb[0].mxu0
      %v439 = vadd.f32 0.0, %v438
      %v440 = vpop.f32.mrb[0].mxu0
      %441 = vmatprep.mubr.bf16.mxu0 0
      %442 = vmatmul.mubr.bf16.gmra.mrb[0].mxu0 %v309
      %v443 = vpop.f32.mrb[0].mxu0
      %v444 = vadd.f32 0.0, %v443
      %v445 = vpop.f32.mrb[0].mxu0
      %v446 = vpop.f32.mrb[0].mxu0
      %v447 = vadd.f32 0.0, %v446
      %v448 = vpop.f32.mrb[0].mxu0
      %449 = vmatprep.mubr.bf16.mxu0 0
      %450 = vmatmul.mubr.bf16.gmra.mrb[0].mxu0 %v312
      %v451 = vpop.f32.mrb[0].mxu0
      %v452 = vadd.f32 0.0, %v451
      %v453 = vpop.f32.mrb[0].mxu0
      %v454 = vpop.f32.mrb[0].mxu0
      %v455 = vadd.f32 0.0, %v454
      %v456 = vpop.f32.mrb[0].mxu0
      %457 = vmatprep.mubr.bf16.mxu0 0
      %458 = vmatmul.mubr.bf16.gmra.mrb[0].mxu0 %v312
      %v459 = vpop.f32.mrb[0].mxu0
      %v460 = vadd.f32 0.0, %v459
      %v461 = vpop.f32.mrb[0].mxu0
      %v462 = vpop.f32.mrb[0].mxu0
      %v463 = vadd.f32 0.0, %v462
      %v464 = vpop.f32.mrb[0].mxu0
      %465 = vmatprep.mubr.bf16.mxu0 0
      %466 = vmatmul.mubr.bf16.gmra.mrb[0].mxu0 %v315
      %v467 = vpop.f32.mrb[0].mxu0
      %v468 = vadd.f32 0.0, %v467
      %v469 = vpop.f32.mrb[0].mxu0
      %v470 = vpop.f32.mrb[0].mxu0
      %v471 = vadd.f32 0.0, %v470
      %v472 = vpop.f32.mrb[0].mxu0
      %473 = vmatprep.mubr.bf16.mxu0 0
      %474 = vmatmul.mubr.bf16.gmra.mrb[0].mxu0 %v315
      %v475 = vpop.f32.mrb[0].mxu0
      %v476 = vadd.f32 0.0, %v475
      %v477 = vpop.f32.mrb[0].mxu0
      %v478 = vpop.f32.mrb[0].mxu0
      %v479 = vadd.f32 0.0, %v478
      %v480 = vpop.f32.mrb[0].mxu0
      %481 = vdwg.mxu0
      %v484 = vunpack.c.l.b16 %v222
      %v485 = vunpack.c.l.b16 %v223
      %v486 = vpack.c.b16 %v485, %v484
      %v489 = vunpack.c.l.b16 %v242
      %v490 = vunpack.c.l.b16 %v243
      %v491 = vpack.c.b16 %v490, %v489
      %v493 = vsel %vm292, %v486, 0
      %v496 = vsel %vm317, %v491, 0
      %498 = vmatprep.subr.bf16.mxu0 0
      %499 = vmatpush1.bf16.msra.mxu0 %v496
      %500 = vmatprep.subr.bf16.mxu0 0
      %501 = vmatpush1.bf16.msra.mxu0 0
      %502 = vmatprep.subr.bf16.mxu0 0
      %503 = vmatpush1.bf16.msra.mxu0 0
      %504 = vmatprep.subr.bf16.mxu0 0
      %505 = vmatpush1.bf16.msra.mxu0 0
      %506 = vmatprep.subr.bf16.mxu0 0
      %507 = vmatpush1.bf16.msra.mxu0 0
      %508 = vmatprep.subr.bf16.mxu0 0
      %509 = vmatpush1.bf16.msra.mxu0 0
      %510 = vmatprep.subr.bf16.mxu0 0
      %511 = vmatpush1.bf16.msra.mxu0 0
      %512 = vmatprep.subr.bf16.mxu0 0
      %513 = vmatpush1.bf16.msra.mxu0 0
      %514 = vmatprep.subr.bf16.mxu0 0
      %515 = vmatpush1.bf16.msra.mxu0 0
      %516 = vmatprep.subr.bf16.mxu0 0
      %517 = vmatpush1.bf16.msra.mxu0 0
      %518 = vmatprep.subr.bf16.mxu0 0
      %519 = vmatpush1.bf16.msra.mxu0 0
      %520 = vmatprep.subr.bf16.mxu0 0
      %521 = vmatpush1.bf16.msra.mxu0 0
      %522 = vmatprep.subr.bf16.mxu0 0
      %523 = vmatpush1.bf16.msra.mxu0 0
      %524 = vmatprep.subr.bf16.mxu0 0
      %525 = vmatpush1.bf16.msra.mxu0 0
      %526 = vmatprep.subr.bf16.mxu0 0
      %527 = vmatpush1.bf16.msra.mxu0 0
      %528 = vmatprep.subr.bf16.mxu0 0
      %529 = vmatpush1.bf16.msra.mxu0 0
      %530 = vmatprep.mubr.bf16.mxu0 0
      %531 = vmatmul.mubr.bf16.gmra.mrb[0].mxu0 %v493
      %v532 = vpop.f32.mrb[0].mxu0
      %v533 = vadd.f32 %v356, %v532
      %v534 = vpop.f32.mrb[0].mxu0
      %v535 = vpop.f32.mrb[0].mxu0
      %v536 = vadd.f32 %v359, %v535
      %v537 = vpop.f32.mrb[0].mxu0
      %538 = vmatprep.mubr.bf16.mxu0 0
      %539 = vmatmul.mubr.bf16.gmra.mrb[0].mxu0 %v294
      %v540 = vpop.f32.mrb[0].mxu0
      %v541 = vadd.f32 %v364, %v540
      %v542 = vpop.f32.mrb[0].mxu0
      %v543 = vpop.f32.mrb[0].mxu0
      %v544 = vadd.f32 %v367, %v543
      %v545 = vpop.f32.mrb[0].mxu0
      %546 = vmatprep.mubr.bf16.mxu0 0
      %547 = vmatmul.mubr.bf16.gmra.mrb[0].mxu0 %v294
      %v548 = vpop.f32.mrb[0].mxu0
      %v549 = vadd.f32 %v372, %v548
      %v550 = vpop.f32.mrb[0].mxu0
      %v551 = vpop.f32.mrb[0].mxu0
      %v552 = vadd.f32 %v375, %v551
      %v553 = vpop.f32.mrb[0].mxu0
      %554 = vmatprep.mubr.bf16.mxu0 0
      %555 = vmatmul.mubr.bf16.gmra.mrb[0].mxu0 %v297
      %v556 = vpop.f32.mrb[0].mxu0
      %v557 = vadd.f32 %v380, %v556
      %v558 = vpop.f32.mrb[0].mxu0
      %v559 = vpop.f32.mrb[0].mxu0
      %v560 = vadd.f32 %v383, %v559
      %v561 = vpop.f32.mrb[0].mxu0
      %562 = vmatprep.mubr.bf16.mxu0 0
      %563 = vmatmul.mubr.bf16.gmra.mrb[0].mxu0 %v297
      %v564 = vpop.f32.mrb[0].mxu0
      %v565 = vadd.f32 %v388, %v564
      %v566 = vpop.f32.mrb[0].mxu0
      %v567 = vpop.f32.mrb[0].mxu0
      %v568 = vadd.f32 %v391, %v567
      %v569 = vpop.f32.mrb[0].mxu0
      %570 = vmatprep.mubr.bf16.mxu0 0
      %571 = vmatmul.mubr.bf16.gmra.mrb[0].mxu0 %v300
      %v572 = vpop.f32.mrb[0].mxu0
      %v573 = vadd.f32 %v396, %v572
      %v574 = vpop.f32.mrb[0].mxu0
      %v575 = vpop.f32.mrb[0].mxu0
      %v576 = vadd.f32 %v399, %v575
      %v577 = vpop.f32.mrb[0].mxu0
      %578 = vmatprep.mubr.bf16.mxu0 0
      %579 = vmatmul.mubr.bf16.gmra.mrb[0].mxu0 %v300
      %v580 = vpop.f32.mrb[0].mxu0
      %v581 = vadd.f32 %v404, %v580
      %v582 = vpop.f32.mrb[0].mxu0
      %v583 = vpop.f32.mrb[0].mxu0
      %v584 = vadd.f32 %v407, %v583
      %v585 = vpop.f32.mrb[0].mxu0
      %586 = vmatprep.mubr.bf16.mxu0 0
      %587 = vmatmul.mubr.bf16.gmra.mrb[0].mxu0 %v303
      %v588 = vpop.f32.mrb[0].mxu0
      %v589 = vadd.f32 %v412, %v588
      %v590 = vpop.f32.mrb[0].mxu0
      %v591 = vpop.f32.mrb[0].mxu0
      %v592 = vadd.f32 %v415, %v591
      %v593 = vpop.f32.mrb[0].mxu0
      %594 = vmatprep.mubr.bf16.mxu0 0
      %595 = vmatmul.mubr.bf16.gmra.mrb[0].mxu0 %v303
      %v596 = vpop.f32.mrb[0].mxu0
      %v597 = vadd.f32 %v420, %v596
      %v598 = vpop.f32.mrb[0].mxu0
      %v599 = vpop.f32.mrb[0].mxu0
      %v600 = vadd.f32 %v423, %v599
      %v601 = vpop.f32.mrb[0].mxu0
      %602 = vmatprep.mubr.bf16.mxu0 0
      %603 = vmatmul.mubr.bf16.gmra.mrb[0].mxu0 %v306
      %v604 = vpop.f32.mrb[0].mxu0
      %v605 = vadd.f32 %v428, %v604
      %v606 = vpop.f32.mrb[0].mxu0
      %v607 = vpop.f32.mrb[0].mxu0
      %v608 = vadd.f32 %v431, %v607
      %v609 = vpop.f32.mrb[0].mxu0
      %610 = vmatprep.mubr.bf16.mxu0 0
      %611 = vmatmul.mubr.bf16.gmra.mrb[0].mxu0 %v306
      %v612 = vpop.f32.mrb[0].mxu0
      %v613 = vadd.f32 %v436, %v612
      %v614 = vpop.f32.mrb[0].mxu0
      %v615 = vpop.f32.mrb[0].mxu0
      %v616 = vadd.f32 %v439, %v615
      %v617 = vpop.f32.mrb[0].mxu0
      %618 = vmatprep.mubr.bf16.mxu0 0
      %619 = vmatmul.mubr.bf16.gmra.mrb[0].mxu0 %v309
      %v620 = vpop.f32.mrb[0].mxu0
      %v621 = vadd.f32 %v444, %v620
      %v622 = vpop.f32.mrb[0].mxu0
      %v623 = vpop.f32.mrb[0].mxu0
      %v624 = vadd.f32 %v447, %v623
      %v625 = vpop.f32.mrb[0].mxu0
      %626 = vmatprep.mubr.bf16.mxu0 0
      %627 = vmatmul.mubr.bf16.gmra.mrb[0].mxu0 %v309
      %v628 = vpop.f32.mrb[0].mxu0
      %v629 = vadd.f32 %v452, %v628
      %v630 = vpop.f32.mrb[0].mxu0
      %v631 = vpop.f32.mrb[0].mxu0
      %v632 = vadd.f32 %v455, %v631
      %v633 = vpop.f32.mrb[0].mxu0
      %634 = vmatprep.mubr.bf16.mxu0 0
      %635 = vmatmul.mubr.bf16.gmra.mrb[0].mxu0 %v312
      %v636 = vpop.f32.mrb[0].mxu0
      %v637 = vadd.f32 %v460, %v636
      %v638 = vpop.f32.mrb[0].mxu0
      %v639 = vpop.f32.mrb[0].mxu0
      %v640 = vadd.f32 %v463, %v639
      %v641 = vpop.f32.mrb[0].mxu0
      %642 = vmatprep.mubr.bf16.mxu0 0
      %643 = vmatmul.mubr.bf16.gmra.mrb[0].mxu0 %v312
      %v644 = vpop.f32.mrb[0].mxu0
      %v645 = vadd.f32 %v468, %v644
      %v646 = vpop.f32.mrb[0].mxu0
      %v647 = vpop.f32.mrb[0].mxu0
      %v648 = vadd.f32 %v471, %v647
      %v649 = vpop.f32.mrb[0].mxu0
      %650 = vmatprep.mubr.bf16.mxu0 0
      %651 = vmatmul.mubr.bf16.gmra.mrb[0].mxu0 %v315
      %v652 = vpop.f32.mrb[0].mxu0
      %v653 = vadd.f32 %v476, %v652
      %v654 = vpop.f32.mrb[0].mxu0
      %v655 = vpop.f32.mrb[0].mxu0
      %v656 = vadd.f32 %v479, %v655
      %v657 = vpop.f32.mrb[0].mxu0
      %658 = vdwg.mxu0
      %s659 = scalar_lea.vmem %s1, 16
      %v660 = vld [vmem:[%s659] sm:$0xf]
      %v661 = vld [vmem:[%s659 + $0x4] sm:$0x3]
      %v664 = vunpack.c.l.b16 %v240
      %v665 = vunpack.c.l.b16 %v241
      %v666 = vpack.c.b16 %v665, %v664
      %v669 = vunpack.c.l.b16 %v660
      %v670 = vunpack.c.l.b16 %v661
      %v671 = vpack.c.b16 %v670, %v669
      %v673 = vsel %vm292, %v666, 0
      %v676 = vsel %vm317, %v671, 0
      %678 = vmatprep.subr.bf16.mxu0 0
      %679 = vmatpush1.bf16.msra.mxu0 %v676
      %680 = vmatprep.subr.bf16.mxu0 0
      %681 = vmatpush1.bf16.msra.mxu0 0
      %682 = vmatprep.subr.bf16.mxu0 0
      %683 = vmatpush1.bf16.msra.mxu0 0
      %684 = vmatprep.subr.bf16.mxu0 0
      %685 = vmatpush1.bf16.msra.mxu0 0
      %686 = vmatprep.subr.bf16.mxu0 0
      %687 = vmatpush1.bf16.msra.mxu0 0
      %688 = vmatprep.subr.bf16.mxu0 0
      %689 = vmatpush1.bf16.msra.mxu0 0
      %690 = vmatprep.subr.bf16.mxu0 0
      %691 = vmatpush1.bf16.msra.mxu0 0
      %692 = vmatprep.subr.bf16.mxu0 0
      %693 = vmatpush1.bf16.msra.mxu0 0
      %694 = vmatprep.subr.bf16.mxu0 0
      %695 = vmatpush1.bf16.msra.mxu0 0
      %696 = vmatprep.subr.bf16.mxu0 0
      %697 = vmatpush1.bf16.msra.mxu0 0
      %698 = vmatprep.subr.bf16.mxu0 0
      %699 = vmatpush1.bf16.msra.mxu0 0
      %700 = vmatprep.subr.bf16.mxu0 0
      %701 = vmatpush1.bf16.msra.mxu0 0
      %702 = vmatprep.subr.bf16.mxu0 0
      %703 = vmatpush1.bf16.msra.mxu0 0
      %704 = vmatprep.subr.bf16.mxu0 0
      %705 = vmatpush1.bf16.msra.mxu0 0
      %706 = vmatprep.subr.bf16.mxu0 0
      %707 = vmatpush1.bf16.msra.mxu0 0
      %708 = vmatprep.subr.bf16.mxu0 0
      %709 = vmatpush1.bf16.msra.mxu0 0
      %710 = vmatprep.mubr.bf16.mxu0 0
      %711 = vmatmul.mubr.bf16.gmra.mrb[0].mxu0 %v294
      %v712 = vpop.f32.mrb[0].mxu0
      %v713 = vadd.f32 0.0, %v712
      %v714 = vpop.f32.mrb[0].mxu0
      %v715 = vpop.f32.mrb[0].mxu0
      %v716 = vadd.f32 0.0, %v715
      %v717 = vpop.f32.mrb[0].mxu0
      %718 = vmatprep.mubr.bf16.mxu0 0
      %719 = vmatmul.mubr.bf16.gmra.mrb[0].mxu0 %v297
      %v720 = vpop.f32.mrb[0].mxu0
      %v721 = vadd.f32 0.0, %v720
      %v722 = vpop.f32.mrb[0].mxu0
      %v723 = vpop.f32.mrb[0].mxu0
      %v724 = vadd.f32 0.0, %v723
      %v725 = vpop.f32.mrb[0].mxu0
      %726 = vmatprep.mubr.bf16.mxu0 0
      %727 = vmatmul.mubr.bf16.gmra.mrb[0].mxu0 %v297
      %v728 = vpop.f32.mrb[0].mxu0
      %v729 = vadd.f32 0.0, %v728
      %v730 = vpop.f32.mrb[0].mxu0
      %v731 = vpop.f32.mrb[0].mxu0
      %v732 = vadd.f32 0.0, %v731
      %v733 = vpop.f32.mrb[0].mxu0
      %734 = vmatprep.mubr.bf16.mxu0 0
      %735 = vmatmul.mubr.bf16.gmra.mrb[0].mxu0 %v300
      %v736 = vpop.f32.mrb[0].mxu0
      %v737 = vadd.f32 0.0, %v736
      %v738 = vpop.f32.mrb[0].mxu0
      %v739 = vpop.f32.mrb[0].mxu0
      %v740 = vadd.f32 0.0, %v739
      %v741 = vpop.f32.mrb[0].mxu0
      %742 = vmatprep.mubr.bf16.mxu0 0
      %743 = vmatmul.mubr.bf16.gmra.mrb[0].mxu0 %v300
      %v744 = vpop.f32.mrb[0].mxu0
      %v745 = vadd.f32 0.0, %v744
      %v746 = vpop.f32.mrb[0].mxu0
      %v747 = vpop.f32.mrb[0].mxu0
      %v748 = vadd.f32 0.0, %v747
      %v749 = vpop.f32.mrb[0].mxu0
      %750 = vmatprep.mubr.bf16.mxu0 0
      %751 = vmatmul.mubr.bf16.gmra.mrb[0].mxu0 %v303
      %v752 = vpop.f32.mrb[0].mxu0
      %v753 = vadd.f32 0.0, %v752
      %v754 = vpop.f32.mrb[0].mxu0
      %v755 = vpop.f32.mrb[0].mxu0
      %v756 = vadd.f32 0.0, %v755
      %v757 = vpop.f32.mrb[0].mxu0
      %758 = vmatprep.mubr.bf16.mxu0 0
      %759 = vmatmul.mubr.bf16.gmra.mrb[0].mxu0 %v303
      %v760 = vpop.f32.mrb[0].mxu0
      %v761 = vadd.f32 0.0, %v760
      %v762 = vpop.f32.mrb[0].mxu0
      %v763 = vpop.f32.mrb[0].mxu0
      %v764 = vadd.f32 0.0, %v763
      %v765 = vpop.f32.mrb[0].mxu0
      %766 = vmatprep.mubr.bf16.mxu0 0
      %767 = vmatmul.mubr.bf16.gmra.mrb[0].mxu0 %v306
      %v768 = vpop.f32.mrb[0].mxu0
      %v769 = vadd.f32 0.0, %v768
      %v770 = vpop.f32.mrb[0].mxu0
      %v771 = vpop.f32.mrb[0].mxu0
      %v772 = vadd.f32 0.0, %v771
      %v773 = vpop.f32.mrb[0].mxu0
      %774 = vmatprep.mubr.bf16.mxu0 0
      %775 = vmatmul.mubr.bf16.gmra.mrb[0].mxu0 %v306
      %v776 = vpop.f32.mrb[0].mxu0
      %v777 = vadd.f32 0.0, %v776
      %v778 = vpop.f32.mrb[0].mxu0
      %v779 = vpop.f32.mrb[0].mxu0
      %v780 = vadd.f32 0.0, %v779
      %v781 = vpop.f32.mrb[0].mxu0
      %782 = vmatprep.mubr.bf16.mxu0 0
      %783 = vmatmul.mubr.bf16.gmra.mrb[0].mxu0 %v309
      %v784 = vpop.f32.mrb[0].mxu0
      %v785 = vadd.f32 0.0, %v784
      %v786 = vpop.f32.mrb[0].mxu0
      %v787 = vpop.f32.mrb[0].mxu0
      %v788 = vadd.f32 0.0, %v787
      %v789 = vpop.f32.mrb[0].mxu0
      %790 = vmatprep.mubr.bf16.mxu0 0
      %791 = vmatmul.mubr.bf16.gmra.mrb[0].mxu0 %v309
      %v792 = vpop.f32.mrb[0].mxu0
      %v793 = vadd.f32 0.0, %v792
      %v794 = vpop.f32.mrb[0].mxu0
      %v795 = vpop.f32.mrb[0].mxu0
      %v796 = vadd.f32 0.0, %v795
      %v797 = vpop.f32.mrb[0].mxu0
      %798 = vmatprep.mubr.bf16.mxu0 0
      %799 = vmatmul.mubr.bf16.gmra.mrb[0].mxu0 %v312
      %v800 = vpop.f32.mrb[0].mxu0
      %v801 = vadd.f32 0.0, %v800
      %v802 = vpop.f32.mrb[0].mxu0
      %v803 = vpop.f32.mrb[0].mxu0
      %v804 = vadd.f32 0.0, %v803
      %v805 = vpop.f32.mrb[0].mxu0
      %806 = vmatprep.mubr.bf16.mxu0 0
      %807 = vmatmul.mubr.bf16.gmra.mrb[0].mxu0 %v312
      %v808 = vpop.f32.mrb[0].mxu0
      %v809 = vadd.f32 0.0, %v808
      %v810 = vpop.f32.mrb[0].mxu0
      %v811 = vpop.f32.mrb[0].mxu0
      %v812 = vadd.f32 0.0, %v811
      %v813 = vpop.f32.mrb[0].mxu0
      %814 = vmatprep.mubr.bf16.mxu0 0
      %815 = vmatmul.mubr.bf16.gmra.mrb[0].mxu0 %v315
      %v816 = vpop.f32.mrb[0].mxu0
      %v817 = vadd.f32 0.0, %v816
      %v818 = vpop.f32.mrb[0].mxu0
      %v819 = vpop.f32.mrb[0].mxu0
      %v820 = vadd.f32 0.0, %v819
      %v821 = vpop.f32.mrb[0].mxu0
      %822 = vmatprep.mubr.bf16.mxu0 0
      %823 = vmatmul.mubr.bf16.gmra.mrb[0].mxu0 %v315
      %v824 = vpop.f32.mrb[0].mxu0
      %v825 = vadd.f32 0.0, %v824
      %v826 = vpop.f32.mrb[0].mxu0
      %v827 = vpop.f32.mrb[0].mxu0
      %v828 = vadd.f32 0.0, %v827
      %v829 = vpop.f32.mrb[0].mxu0
      %830 = vmatprep.mubr.bf16.mxu0 0
      %831 = vmatmul.mubr.bf16.gmra.mrb[0].mxu0 %v673
      %v832 = vpop.f32.mrb[0].mxu0
      %v833 = vadd.f32 0.0, %v832
      %v834 = vpop.f32.mrb[0].mxu0
      %v835 = vpop.f32.mrb[0].mxu0
      %v836 = vadd.f32 0.0, %v835
      %v837 = vpop.f32.mrb[0].mxu0
      %838 = vdwg.mxu0
      %v839 = vadd.f32 %v533, %v713
      %v840 = vadd.f32 %v536, %v716
      %v841 = vadd.f32 %v541, %v721
      %v842 = vadd.f32 %v544, %v724
      %v843 = vadd.f32 %v549, %v729
      %v844 = vadd.f32 %v552, %v732
      %v845 = vadd.f32 %v557, %v737
      %v846 = vadd.f32 %v560, %v740
      %v847 = vadd.f32 %v565, %v745
      %v848 = vadd.f32 %v568, %v748
      %v849 = vadd.f32 %v573, %v753
      %v850 = vadd.f32 %v576, %v756
      %v851 = vadd.f32 %v581, %v761
      %v852 = vadd.f32 %v584, %v764
      %v853 = vadd.f32 %v589, %v769
      %v854 = vadd.f32 %v592, %v772
      %v855 = vadd.f32 %v597, %v777
      %v856 = vadd.f32 %v600, %v780
      %v857 = vadd.f32 %v605, %v785
      %v858 = vadd.f32 %v608, %v788
      %v859 = vadd.f32 %v613, %v793
      %v860 = vadd.f32 %v616, %v796
      %v861 = vadd.f32 %v621, %v801
      %v862 = vadd.f32 %v624, %v804
      %v863 = vadd.f32 %v629, %v809
      %v864 = vadd.f32 %v632, %v812
      %v865 = vadd.f32 %v637, %v817
      %v866 = vadd.f32 %v640, %v820
      %v867 = vadd.f32 %v645, %v825
      %v868 = vadd.f32 %v648, %v828
      %v869 = vadd.f32 %v653, %v833
      %v870 = vadd.f32 %v656, %v836
      %vm871 = vcmask 130048
      %v872 = vsel %vm871, %v839, 0.0
      %v873 = vsel %vm871, %v840, 0.0
      %v874 = vadd.f32 %v872, %v873
      %v875 = vsel %vm871, %v841, 0.0
      %v876 = vadd.f32 %v874, %v875
      %v877 = vsel %vm871, %v842, 0.0
      %v878 = vadd.f32 %v876, %v877
      %v879 = vsel %vm871, %v843, 0.0
      %v880 = vadd.f32 %v878, %v879
      %v881 = vsel %vm871, %v844, 0.0
      %v882 = vadd.f32 %v880, %v881
      %v883 = vsel %vm871, %v845, 0.0
      %v884 = vadd.f32 %v882, %v883
      %v885 = vsel %vm871, %v846, 0.0
      %v886 = vadd.f32 %v884, %v885
      %v887 = vsel %vm871, %v847, 0.0
      %v888 = vadd.f32 %v886, %v887
      %v889 = vsel %vm871, %v848, 0.0
      %v890 = vadd.f32 %v888, %v889
      %v891 = vsel %vm871, %v849, 0.0
      %v892 = vadd.f32 %v890, %v891
      %v893 = vsel %vm871, %v850, 0.0
      %v894 = vadd.f32 %v892, %v893
      %v895 = vsel %vm871, %v851, 0.0
      %v896 = vadd.f32 %v894, %v895
      %v897 = vsel %vm871, %v852, 0.0
      %v898 = vadd.f32 %v896, %v897
      %v899 = vsel %vm871, %v853, 0.0
      %v900 = vadd.f32 %v898, %v899
      %v901 = vsel %vm871, %v854, 0.0
      %v902 = vadd.f32 %v900, %v901
      %v903 = vsel %vm871, %v855, 0.0
      %v904 = vadd.f32 %v902, %v903
      %v905 = vsel %vm871, %v856, 0.0
      %v906 = vadd.f32 %v904, %v905
      %v907 = vsel %vm871, %v857, 0.0
      %v908 = vadd.f32 %v906, %v907
      %v909 = vsel %vm871, %v858, 0.0
      %v910 = vadd.f32 %v908, %v909
      %v911 = vsel %vm871, %v859, 0.0
      %v912 = vadd.f32 %v910, %v911
      %v913 = vsel %vm871, %v860, 0.0
      %v914 = vadd.f32 %v912, %v913
      %v915 = vsel %vm871, %v861, 0.0
      %v916 = vadd.f32 %v914, %v915
      %v917 = vsel %vm871, %v862, 0.0
      %v918 = vadd.f32 %v916, %v917
      %v919 = vsel %vm871, %v863, 0.0
      %v920 = vadd.f32 %v918, %v919
      %v921 = vsel %vm871, %v864, 0.0
      %v922 = vadd.f32 %v920, %v921
      %v923 = vsel %vm871, %v865, 0.0
      %v924 = vadd.f32 %v922, %v923
      %v925 = vsel %vm871, %v866, 0.0
      %v926 = vadd.f32 %v924, %v925
      %v927 = vsel %vm871, %v867, 0.0
      %v928 = vadd.f32 %v926, %v927
      %v929 = vsel %vm871, %v868, 0.0
      %v930 = vadd.f32 %v928, %v929
      %v931 = vsel %vm871, %v869, 0.0
      %v932 = vadd.f32 %v930, %v931
      %v933 = vsel %vm871, %v870, 0.0
      %v934 = vadd.f32 %v932, %v933
      %v935 = vrot.slane %v934, 4
      %v936 = vadd.f32 %v934, %v935
      %v937 = vrot.slane %v936, 2
      %v938 = vadd.f32 %v936, %v937
      %v939 = vrot.slane %v938, 1
      %v940 = vadd.f32 %v938, %v939
      %vm941 = vcmask 122880
      %942 = vst.msk [vmem:[%s216] sm:$0x1] %vm941, %v940
      %v943 = vmul.f32 %v839, %v839
      %v944 = vmul.f32 %v840, %v840
      %v945 = vmul.f32 %v841, %v841
      %v946 = vmul.f32 %v842, %v842
      %v947 = vmul.f32 %v843, %v843
      %v948 = vmul.f32 %v844, %v844
      %v949 = vmul.f32 %v845, %v845
      %v950 = vmul.f32 %v846, %v846
      %v951 = vmul.f32 %v847, %v847
      %v952 = vmul.f32 %v848, %v848
      %v953 = vmul.f32 %v849, %v849
      %v954 = vmul.f32 %v850, %v850
      %v955 = vmul.f32 %v851, %v851
      %v956 = vmul.f32 %v852, %v852
      %v957 = vmul.f32 %v853, %v853
      %v958 = vmul.f32 %v854, %v854
      %v959 = vmul.f32 %v855, %v855
      %v960 = vmul.f32 %v856, %v856
      %v961 = vmul.f32 %v857, %v857
      %v962 = vmul.f32 %v858, %v858
      %v963 = vmul.f32 %v859, %v859
      %v964 = vmul.f32 %v860, %v860
      %v965 = vmul.f32 %v861, %v861
      %v966 = vmul.f32 %v862, %v862
      %v967 = vmul.f32 %v863, %v863
      %v968 = vmul.f32 %v864, %v864
      %v969 = vmul.f32 %v865, %v865
      %v970 = vmul.f32 %v866, %v866
      %v971 = vmul.f32 %v867, %v867
      %v972 = vmul.f32 %v868, %v868
      %v973 = vmul.f32 %v869, %v869
      %v974 = vmul.f32 %v870, %v870
      %v975 = vsel %vm871, %v943, 0.0
      %v976 = vsel %vm871, %v944, 0.0
      %v977 = vadd.f32 %v975, %v976
      %v978 = vsel %vm871, %v945, 0.0
      %v979 = vadd.f32 %v977, %v978
      %v980 = vsel %vm871, %v946, 0.0
      %v981 = vadd.f32 %v979, %v980
      %v982 = vsel %vm871, %v947, 0.0
      %v983 = vadd.f32 %v981, %v982
      %v984 = vsel %vm871, %v948, 0.0
      %v985 = vadd.f32 %v983, %v984
      %v986 = vsel %vm871, %v949, 0.0
      %v987 = vadd.f32 %v985, %v986
      %v988 = vsel %vm871, %v950, 0.0
      %v989 = vadd.f32 %v987, %v988
      %v990 = vsel %vm871, %v951, 0.0
      %v991 = vadd.f32 %v989, %v990
      %v992 = vsel %vm871, %v952, 0.0
      %v993 = vadd.f32 %v991, %v992
      %v994 = vsel %vm871, %v953, 0.0
      %v995 = vadd.f32 %v993, %v994
      %v996 = vsel %vm871, %v954, 0.0
      %v997 = vadd.f32 %v995, %v996
      %v998 = vsel %vm871, %v955, 0.0
      %v999 = vadd.f32 %v997, %v998
      %v1000 = vsel %vm871, %v956, 0.0
      %v1001 = vadd.f32 %v999, %v1000
      %v1002 = vsel %vm871, %v957, 0.0
      %v1003 = vadd.f32 %v1001, %v1002
      %v1004 = vsel %vm871, %v958, 0.0
      %v1005 = vadd.f32 %v1003, %v1004
      %v1006 = vsel %vm871, %v959, 0.0
      %v1007 = vadd.f32 %v1005, %v1006
      %v1008 = vsel %vm871, %v960, 0.0
      %v1009 = vadd.f32 %v1007, %v1008
      %v1010 = vsel %vm871, %v961, 0.0
      %v1011 = vadd.f32 %v1009, %v1010
      %v1012 = vsel %vm871, %v962, 0.0
      %v1013 = vadd.f32 %v1011, %v1012
      %v1014 = vsel %vm871, %v963, 0.0
      %v1015 = vadd.f32 %v1013, %v1014
      %v1016 = vsel %vm871, %v964, 0.0
      %v1017 = vadd.f32 %v1015, %v1016
      %v1018 = vsel %vm871, %v965, 0.0
      %v1019 = vadd.f32 %v1017, %v1018
      %v1020 = vsel %vm871, %v966, 0.0
      %v1021 = vadd.f32 %v1019, %v1020
      %v1022 = vsel %vm871, %v967, 0.0
      %v1023 = vadd.f32 %v1021, %v1022
      %v1024 = vsel %vm871, %v968, 0.0
      %v1025 = vadd.f32 %v1023, %v1024
      %v1026 = vsel %vm871, %v969, 0.0
      %v1027 = vadd.f32 %v1025, %v1026
      %v1028 = vsel %vm871, %v970, 0.0
      %v1029 = vadd.f32 %v1027, %v1028
      %v1030 = vsel %vm871, %v971, 0.0
      %v1031 = vadd.f32 %v1029, %v1030
      %v1032 = vsel %vm871, %v972, 0.0
      %v1033 = vadd.f32 %v1031, %v1032
      %v1034 = vsel %vm871, %v973, 0.0
      %v1035 = vadd.f32 %v1033, %v1034
      %v1036 = vsel %vm871, %v974, 0.0
      %v1037 = vadd.f32 %v1035, %v1036
      %v1038 = vrot.slane %v1037, 4
      %v1039 = vadd.f32 %v1037, %v1038
      %v1040 = vrot.slane %v1039, 2
      %v1041 = vadd.f32 %v1039, %v1040
      %v1042 = vrot.slane %v1041, 1
      %v1043 = vadd.f32 %v1041, %v1042
      %1044 = vst.msk [vmem:[%s216 + $0x1] sm:$0x1] %vm941, %v1043
      %v1045 = vpack.c.bf16 %v840, %v839
      %v1046 = vpack.c.bf16 %v842, %v841
      %v1047 = vpack.c.bf16 %v844, %v843
      %v1048 = vpack.c.bf16 %v846, %v845
      %v1049 = vpack.c.bf16 %v848, %v847
      %v1050 = vpack.c.bf16 %v850, %v849
      %v1051 = vpack.c.bf16 %v852, %v851
      %v1052 = vpack.c.bf16 %v854, %v853
      %v1053 = vpack.c.bf16 %v856, %v855
      %v1054 = vpack.c.bf16 %v858, %v857
      %v1055 = vpack.c.bf16 %v860, %v859
      %v1056 = vpack.c.bf16 %v862, %v861
      %v1057 = vpack.c.bf16 %v864, %v863
      %v1058 = vpack.c.bf16 %v866, %v865
      %v1059 = vpack.c.bf16 %v868, %v867
      %v1060 = vpack.c.bf16 %v870, %v869
      %v1077 = vunpack.c.l.b16 %v1045
      %v1078 = vunpack.c.h.b16 %v1045
      %v1079 = vunpack.c.l.b16 %v1046
      %v1080 = vunpack.c.h.b16 %v1046
      %v1081 = vunpack.c.l.b16 %v1047
      %v1082 = vunpack.c.h.b16 %v1047
      %v1083 = vunpack.c.l.b16 %v1048
      %v1084 = vunpack.c.h.b16 %v1048
      %v1085 = vunpack.c.l.b16 %v1049
      %v1086 = vunpack.c.h.b16 %v1049
      %v1087 = vunpack.c.l.b16 %v1050
      %v1088 = vunpack.c.h.b16 %v1050
      %v1089 = vunpack.c.l.b16 %v1051
      %v1090 = vunpack.c.h.b16 %v1051
      %v1091 = vunpack.c.l.b16 %v1052
      %v1092 = vunpack.c.h.b16 %v1052
      %v1093 = vunpack.c.l.b16 %v1053
      %v1094 = vunpack.c.h.b16 %v1053
      %v1095 = vunpack.c.l.b16 %v1054
      %v1096 = vunpack.c.h.b16 %v1054
      %v1097 = vunpack.c.l.b16 %v1055
      %v1098 = vunpack.c.h.b16 %v1055
      %v1099 = vunpack.c.l.b16 %v1056
      %v1100 = vunpack.c.h.b16 %v1056
      %v1101 = vunpack.c.l.b16 %v1057
      %v1102 = vunpack.c.h.b16 %v1057
      %v1103 = vunpack.c.l.b16 %v1058
      %v1104 = vunpack.c.h.b16 %v1058
      %v1105 = vunpack.c.l.b16 %v1059
      %v1106 = vunpack.c.h.b16 %v1059
      %v1107 = vunpack.c.l.b16 %v1060
      %v1108 = vunpack.c.h.b16 %v1060
      %v1109 = vpack.c.b16 %v1077, %v1077
      %v1110 = vpack.c.b16 %v1078, %v1078
      %v1111 = vpack.c.b16 %v1079, %v1079
      %v1112 = vpack.c.b16 %v1080, %v1080
      %v1113 = vpack.c.b16 %v1081, %v1081
      %v1114 = vpack.c.b16 %v1082, %v1082
      %v1115 = vpack.c.b16 %v1083, %v1083
      %v1116 = vpack.c.b16 %v1084, %v1084
      %v1117 = vpack.c.b16 %v1085, %v1085
      %v1118 = vpack.c.b16 %v1086, %v1086
      %v1119 = vpack.c.b16 %v1087, %v1087
      %v1120 = vpack.c.b16 %v1088, %v1088
      %v1121 = vpack.c.b16 %v1089, %v1089
      %v1122 = vpack.c.b16 %v1090, %v1090
      %v1123 = vpack.c.b16 %v1091, %v1091
      %v1124 = vpack.c.b16 %v1092, %v1092
      %v1125 = vpack.c.b16 %v1093, %v1093
      %v1126 = vpack.c.b16 %v1094, %v1094
      %v1127 = vpack.c.b16 %v1095, %v1095
      %v1128 = vpack.c.b16 %v1096, %v1096
      %v1129 = vpack.c.b16 %v1097, %v1097
      %v1130 = vpack.c.b16 %v1098, %v1098
      %v1131 = vpack.c.b16 %v1099, %v1099
      %v1132 = vpack.c.b16 %v1100, %v1100
      %v1133 = vpack.c.b16 %v1101, %v1101
      %v1134 = vpack.c.b16 %v1102, %v1102
      %v1135 = vpack.c.b16 %v1103, %v1103
      %v1136 = vpack.c.b16 %v1104, %v1104
      %v1137 = vpack.c.b16 %v1105, %v1105
      %v1138 = vpack.c.b16 %v1106, %v1106
      %v1139 = vpack.c.b16 %v1107, %v1107
      %v1140 = vpack.c.b16 %v1108, %v1108
      %vm1173 = vcmask 125952
      %1174 = vst.msk [vmem:[%s207] sm:$0xf] %vm1173, %v1109
      %1175 = vst.msk [vmem:[%s207 + $0x4] sm:$0xf] %vm1173, %v1110
      %1176 = vst.msk [vmem:[%s207 + $0x8] sm:$0xf] %vm1173, %v1111
      %1177 = vst.msk [vmem:[%s207 + $0xc] sm:$0xf] %vm1173, %v1112
      %1178 = vst.msk [vmem:[%s207 + $0x10] sm:$0xf] %vm1173, %v1113
      %1179 = vst.msk [vmem:[%s207 + $0x14] sm:$0xf] %vm1173, %v1114
      %1180 = vst.msk [vmem:[%s207 + $0x18] sm:$0xf] %vm1173, %v1115
      %1181 = vst.msk [vmem:[%s207 + $0x1c] sm:$0xf] %vm1173, %v1116
      %1182 = vst.msk [vmem:[%s207 + $0x20] sm:$0xf] %vm1173, %v1117
      %1183 = vst.msk [vmem:[%s207 + $0x24] sm:$0xf] %vm1173, %v1118
      %1184 = vst.msk [vmem:[%s207 + $0x28] sm:$0xf] %vm1173, %v1119
      %1185 = vst.msk [vmem:[%s207 + $0x2c] sm:$0xf] %vm1173, %v1120
      %1186 = vst.msk [vmem:[%s207 + $0x30] sm:$0xf] %vm1173, %v1121
      %1187 = vst.msk [vmem:[%s207 + $0x34] sm:$0xf] %vm1173, %v1122
      %1188 = vst.msk [vmem:[%s207 + $0x38] sm:$0xf] %vm1173, %v1123
      %1189 = vst.msk [vmem:[%s207 + $0x3c] sm:$0xf] %vm1173, %v1124
      %1190 = vst.msk [vmem:[%s207 + $0x40] sm:$0xf] %vm1173, %v1125
      %1191 = vst.msk [vmem:[%s207 + $0x44] sm:$0xf] %vm1173, %v1126
      %1192 = vst.msk [vmem:[%s207 + $0x48] sm:$0xf] %vm1173, %v1127
      %1193 = vst.msk [vmem:[%s207 + $0x4c] sm:$0xf] %vm1173, %v1128
      %1194 = vst.msk [vmem:[%s207 + $0x50] sm:$0xf] %vm1173, %v1129
      %1195 = vst.msk [vmem:[%s207 + $0x54] sm:$0xf] %vm1173, %v1130
      %1196 = vst.msk [vmem:[%s207 + $0x58] sm:$0xf] %vm1173, %v1131
      %1197 = vst.msk [vmem:[%s207 + $0x5c] sm:$0xf] %vm1173, %v1132
      %1198 = vst.msk [vmem:[%s207 + $0x60] sm:$0xf] %vm1173, %v1133
      %1199 = vst.msk [vmem:[%s207 + $0x64] sm:$0xf] %vm1173, %v1134
      %1200 = vst.msk [vmem:[%s207 + $0x68] sm:$0xf] %vm1173, %v1135
      %1201 = vst.msk [vmem:[%s207 + $0x6c] sm:$0xf] %vm1173, %v1136
      %1202 = vst.msk [vmem:[%s207 + $0x70] sm:$0xf] %vm1173, %v1137
      %1203 = vst.msk [vmem:[%s207 + $0x74] sm:$0xf] %vm1173, %v1138
      %1204 = vst.msk [vmem:[%s207 + $0x78] sm:$0xf] %vm1173, %v1139
      %1205 = vst.msk [vmem:[%s207 + $0x7c] sm:$0xf] %vm1173, %v1140
      %s1206 = smul.u32 16, %s20
      %p1207 = scmp.lt.s32.totalorder %s19, 1
      %s1208 = scalar_select %p1207, %s19, 1
      %p1209 = scmp.lt.s32.totalorder %s1206, 31
      %s1210 = scalar_select %p1209, %s1206, 31
      %s1211 = smul.addr %s1210, 2
      %s1212 = smul.addr %s1208, 64
      %s1213 = sadd.s32 %s1211, %s1212
      %s1214 = smul.addr %s1213, 4
      %s1215 = scalar_lea.vmem %s2, %s1214
      %p1216 = scmp.lt.s32.totalorder %s19, 1
      %s1217 = scalar_select %p1216, %s19, 1
      %p1218 = scmp.lt.s32.totalorder %s20, 1
      %s1219 = scalar_select %p1218, %s20, 1
      %s1220 = smul.addr %s1217, 2
      %s1221 = sadd.s32 %s1219, %s1220
      %s1222 = smul.addr %s1221, 2
      %s1223 = scalar_lea.vmem %s3, %s1222
      // Predicated region
      $region29: #{up_conv_forward.2} parent=27 // pred_check
        %p1224 = pneg %p94
      $region30: #{up_conv_forward.2} parent=27 // pred_check_branch
        %1226 = sbr.rel (%p1224) target = $region32
      $region31: #{up_conv_forward.2} parent=27 // pred_region
        %s1227 = smul.u32 16, %s20
      $region32: #{up_conv_forward.2} parent=27 // pred_fallthru
        _
      // Predicated region
      $region33: #{up_conv_forward.2} parent=27 // pred_check
        %p1228 = pneg %p122
      $region34: #{up_conv_forward.2} parent=27 // pred_check_branch
        %1230 = sbr.rel (%p1228) target = $region36
      $region35: #{up_conv_forward.2} parent=27 // pred_region
        _
      $region36: #{up_conv_forward.2} parent=27 // pred_fallthru
        _
    $region28: #{up_conv_forward.2} parent=5 // pred_fallthru
      _
    %p1231 = scmp.le.s32.totalorder 2, %s10
    // Predicated region
    $region37: #{up_conv_forward.2} parent=5 // pred_check
      %p1232 = pneg %p1231
    $region38: #{up_conv_forward.2} parent=5 // pred_check_branch
      %1234 = sbr.rel (%p1232) target = $region40
    $region39: #{up_conv_forward.2} parent=5 // pred_region
      %s1235 = ssub.s32 %s10, 2
      // Predicated region
      $region41: #{up_conv_forward.2} parent=39 // pred_check
        %p1236 = pneg %p100
      $region42: #{up_conv_forward.2} parent=39 // pred_check_branch
        %1238 = sbr.rel (%p1236) target = $region44
      $region43: #{up_conv_forward.2} parent=39 // pred_region
        %s1239 = smul.u32 16, %s22
        %p1240 = scmp.lt.s32.totalorder %s21, 1
        %s1241 = scalar_select %p1240, %s21, 1
        %p1242 = scmp.lt.s32.totalorder %s1239, 31
        %s1243 = scalar_select %p1242, %s1239, 31
        %s1244 = smul.addr %s1243, 2
        %s1245 = smul.addr %s1241, 64
        %s1246 = sadd.s32 %s1244, %s1245
        %s1247 = smul.addr %s1246, 4
        %s1248 = scalar_lea.vmem %s2, %s1247
      $region44: #{up_conv_forward.2} parent=39 // pred_fallthru
        _
      // Predicated region
      $region45: #{up_conv_forward.2} parent=39 // pred_check
        %p1249 = pneg %p128
      $region46: #{up_conv_forward.2} parent=39 // pred_check_branch
        %1251 = sbr.rel (%p1249) target = $region48
      $region47: #{up_conv_forward.2} parent=39 // pred_region
        %p1252 = scmp.lt.s32.totalorder %s21, 1
        %s1253 = scalar_select %p1252, %s21, 1
        %p1254 = scmp.lt.s32.totalorder %s22, 1
        %s1255 = scalar_select %p1254, %s22, 1
        %s1256 = smul.addr %s1253, 2
        %s1257 = sadd.s32 %s1255, %s1256
        %s1258 = smul.addr %s1257, 2
        %s1259 = scalar_lea.vmem %s3, %s1258
      $region48: #{up_conv_forward.2} parent=39 // pred_fallthru
        _
    $region40: #{up_conv_forward.2} parent=5 // pred_fallthru
      _
  $region6: #{up_conv_forward.2} parent=0 // loop_footer
    %s14 = sadd.s32 1, %s10
  $region7: #{up_conv_forward.2} parent=0 // loop_footer_branch
    %9 = sbr.rel target = $region3
  $region8: #{up_conv_forward.2} parent=0 // loop_exit
    _

</llo_original>
